<compile_context>
chip_gen: v7x
topology: tpu7x:2x2x1
jax: 0.10.0
libtpu: 0.0.40
codegen_flags: <defaults>
</compile_context>

<pallas_src>
import jax
import jax.numpy as jnp
from jax.experimental import pallas as pl
from jax.experimental.pallas import tpu as pltpu

N_OBSERVATIONS = 8    # LunarLander-v2 observation size
N_ACTIONS = 4         # LunarLander-v2 action count
HIDDEN = 128
OUT_PAD = 8           # n_actions padded 4 -> 8 (full-extent last dim)
BLOCK_B = 512         # batch tile; common DQN batches run in 1-2 grid steps


def _round_up(x, m):
    return ((x + m - 1) // m) * m


def dqn_mlp_kernel(x_ref, w1_ref, b1_ref, w2_ref, b2_ref, w3_ref, b3_ref, o_ref):
    # Matmuls: bf16 operands, f32 accumulation on the MXU.
    # Epilogue (bias add + ReLU) in f32 on the VPU (portable to v5e).
    x = x_ref[...].astype(jnp.bfloat16)                                   # (blk, 8)
    h1 = jnp.dot(x, w1_ref[...], preferred_element_type=jnp.float32)      # (blk, 128)
    h1 = jnp.maximum(h1 + b1_ref[...], 0.0)                               # bias bcast over sublanes
    h2 = jnp.dot(h1.astype(jnp.bfloat16), w2_ref[...],
                 preferred_element_type=jnp.float32)                      # (blk, 128)
    h2 = jnp.maximum(h2 + b2_ref[...], 0.0)
    out = jnp.dot(h2.astype(jnp.bfloat16), w3_ref[...],
                  preferred_element_type=jnp.float32)                     # (blk, 8)
    o_ref[...] = (out + b3_ref[...]).astype(o_ref.dtype)


def init_params(key):
    """f32 params, stored as (in, out) so the forward is x @ W + b (matches nn.Linear)."""
    k1, k2, k3, k4, k5, k6 = jax.random.split(key, 6)
    w1 = jax.random.normal(k1, (N_OBSERVATIONS, HIDDEN), jnp.float32) * 0.1
    b1 = jax.random.normal(k4, (HIDDEN,), jnp.float32) * 0.01
    w2 = jax.random.normal(k2, (HIDDEN, HIDDEN), jnp.float32) * 0.05
    b2 = jax.random.normal(k5, (HIDDEN,), jnp.float32) * 0.01
    w3 = jax.random.normal(k3, (HIDDEN, N_ACTIONS), jnp.float32) * 0.05
    b3 = jax.random.normal(k6, (N_ACTIONS,), jnp.float32) * 0.01
    return (w1, b1, w2, b2, w3, b3)


def prepare_params(params):
    """Cast weights to bf16; pad only the tiny output head 4 -> 8 columns.

    Biases stay (1, H) f32 (broadcast happens in-kernel), so prepared params
    are independent of the batch tile size.
    """
    w1, b1, w2, b2, w3, b3 = params
    w1p = w1.astype(jnp.bfloat16)                                          # (8, 128)
    w2p = w2.astype(jnp.bfloat16)                                          # (128, 128)
    w3p = (jnp.zeros((HIDDEN, OUT_PAD), jnp.float32)
           .at[:, :N_ACTIONS].set(w3).astype(jnp.bfloat16))                # (128, 8)
    b1p = b1.astype(jnp.float32).reshape(1, HIDDEN)                        # (1, 128)
    b2p = b2.astype(jnp.float32).reshape(1, HIDDEN)                        # (1, 128)
    b3p = jnp.zeros((1, OUT_PAD), jnp.float32).at[0, :N_ACTIONS].set(b3)   # (1, 8)
    return (w1p, b1p, w2p, b2p, w3p, b3p)


def dqn_forward(x, prepared, block_b=BLOCK_B):
    """x: (B, n_observations) f32 -> (B, n_actions) f32."""
    w1p, b1p, w2p, b2p, w3p, b3p = prepared
    B, n_obs = x.shape

    # Batch tile: at most block_b; for small batches shrink to a sublane multiple.
    eff_block = min(block_b, _round_up(B, 8))
    padded_b = _round_up(B, eff_block)
    if padded_b != B:
        # Ragged batch: zero-pad the trailing rows (never consumed after [:B] slice).
        xp = jnp.zeros((padded_b, n_obs), x.dtype).at[:B].set(x)
    else:
        xp = x  # common case: no wrapper-side pad pass at all

    grid = (padded_b // eff_block,)

    layer_flops = n_obs * HIDDEN + HIDDEN * HIDDEN + HIDDEN * OUT_PAD
    cost = pl.CostEstimate(
        flops=2 * padded_b * layer_flops,
        transcendentals=0,
        bytes_accessed=(padded_b * n_obs * 4 + padded_b * OUT_PAD * 4
                        + layer_flops * 2 + (2 * HIDDEN + OUT_PAD) * 4),
    )

    out = pl.pallas_call(
        dqn_mlp_kernel,
        out_shape=jax.ShapeDtypeStruct((padded_b, OUT_PAD), jnp.float32),
        grid=grid,
        in_specs=[
            pl.BlockSpec((eff_block, n_obs), lambda i: (i, 0)),     # x tile streams
            pl.BlockSpec((n_obs, HIDDEN), lambda i: (0, 0)),        # w1 resident
            pl.BlockSpec((1, HIDDEN), lambda i: (0, 0)),            # b1 resident
            pl.BlockSpec((HIDDEN, HIDDEN), lambda i: (0, 0)),       # w2 resident
            pl.BlockSpec((1, HIDDEN), lambda i: (0, 0)),            # b2 resident
            pl.BlockSpec((HIDDEN, OUT_PAD), lambda i: (0, 0)),      # w3 resident
            pl.BlockSpec((1, OUT_PAD), lambda i: (0, 0)),           # b3 resident
        ],
        out_specs=pl.BlockSpec((eff_block, OUT_PAD), lambda i: (i, 0)),
        compiler_params=pltpu.CompilerParams(
            dimension_semantics=("parallel",),   # shard batch tiles across TCs on v7x
        ),
        cost_estimate=cost,
    )(xp, w1p, b1p, w2p, b2p, w3p, b3p)
    return out[:B, :N_ACTIONS]


def reference_forward(x, params):
    """Pure-JAX f32 reference for correctness check."""
    w1, b1, w2, b2, w3, b3 = params
    h = jnp.maximum(x @ w1 + b1, 0.0)
    h = jnp.maximum(h @ w2 + b2, 0.0)
    return h @ w3 + b3


if __name__ == "__main__":
    key = jax.random.PRNGKey(0)
    kx1, kx2, kp = jax.random.split(key, 3)
    params = init_params(kp)
    prepared = prepare_params(params)

    fwd = jax.jit(dqn_forward)

    # Case 1: replay-buffer style batch, exact multiple of the tile -> 1 grid
    # step, no wrapper pad/slice passes on the input.
    x1 = jax.random.normal(kx1, (512, N_OBSERVATIONS), jnp.float32)
    out1 = jax.block_until_ready(fwd(x1, prepared))
    ref1 = reference_forward(x1, params)
    assert out1.shape == (512, N_ACTIONS)
    # bf16 operands on the MXU -> loosened tolerance vs f32 reference.
    assert jnp.allclose(out1, ref1, atol=5e-2, rtol=5e-2), "mismatch vs reference (batch 512)"

    # Case 2: small ragged batch (inference-style) exercising the pad/slice path.
    x2 = jax.random.normal(kx2, (37, N_OBSERVATIONS), jnp.float32)
    out2 = jax.block_until_ready(fwd(x2, prepared))
    ref2 = reference_forward(x2, params)
    assert out2.shape == (37, N_ACTIONS)
    assert jnp.allclose(out2, ref2, atol=5e-2, rtol=5e-2), "mismatch vs reference (batch 37)"

    print("KERNEL_OK")
</pallas_src>

<mosaic_0001>
module attributes {stable_mosaic.version = 11 : i64} {
  func.func @dqn_mlp_kernel(%arg0: i32, %arg1: memref<512x8xf32, #tpu.memory_space<vmem>>, %arg2: memref<8x128xbf16, #tpu.memory_space<vmem>>, %arg3: memref<1x128xf32, #tpu.memory_space<vmem>>, %arg4: memref<128x128xbf16, #tpu.memory_space<vmem>>, %arg5: memref<1x128xf32, #tpu.memory_space<vmem>>, %arg6: memref<128x8xbf16, #tpu.memory_space<vmem>>, %arg7: memref<1x8xf32, #tpu.memory_space<vmem>>, %arg8: memref<512x8xf32, #tpu.memory_space<vmem>>) attributes {dimension_semantics = [#tpu.dimension_semantics<parallel>], iteration_bounds = array<i64: 1>, scalar_prefetch = 0 : i64, scratch_operands = 0 : i64, tpu.core_type = #tpu.core_type<tc>, window_params = [{transform_indices = @transform_0, window_bounds = array<i64: 512, 8>}, {pipeline_mode = #tpu.pipeline_mode<synchronous>, transform_indices = @transform_1, window_bounds = array<i64: 8, 128>}, {pipeline_mode = #tpu.pipeline_mode<synchronous>, transform_indices = @transform_2, window_bounds = array<i64: 1, 128>}, {pipeline_mode = #tpu.pipeline_mode<synchronous>, transform_indices = @transform_3, window_bounds = array<i64: 128, 128>}, {pipeline_mode = #tpu.pipeline_mode<synchronous>, transform_indices = @transform_4, window_bounds = array<i64: 1, 128>}, {pipeline_mode = #tpu.pipeline_mode<synchronous>, transform_indices = @transform_5, window_bounds = array<i64: 128, 8>}, {pipeline_mode = #tpu.pipeline_mode<synchronous>, transform_indices = @transform_6, window_bounds = array<i64: 1, 8>}, {transform_indices = @transform_7, window_bounds = array<i64: 512, 8>}]} {
    %c0 = arith.constant 0 : index
    %c0_0 = arith.constant 0 : index
    %0 = vector.load %arg1[%c0, %c0_0] : memref<512x8xf32, #tpu.memory_space<vmem>>, vector<512x8xf32>
    %1 = arith.truncf %0 : vector<512x8xf32> to vector<512x8xbf16>
    %c0_1 = arith.constant 0 : index
    %c0_2 = arith.constant 0 : index
    %2 = vector.load %arg2[%c0_1, %c0_2] : memref<8x128xbf16, #tpu.memory_space<vmem>>, vector<8x128xbf16>
    %cst = arith.constant dense<0.000000e+00> : vector<512x128xf32>
    %3 = tpu.matmul %1, %2, %cst {dimension_numbers = #tpu.dot_dimension_numbers<[1], [0], [0], [1], [0, 0, 1, 1], [], []>} : vector<512x8xbf16>, vector<8x128xbf16>, vector<512x128xf32> -> vector<512x128xf32>
    %c0_3 = arith.constant 0 : index
    %c0_4 = arith.constant 0 : index
    %4 = vector.load %arg3[%c0_3, %c0_4] : memref<1x128xf32, #tpu.memory_space<vmem>>, vector<1x128xf32>
    %5 = vector.broadcast %4 : vector<1x128xf32> to vector<512x128xf32>
    %6 = arith.addf %3, %5 : vector<512x128xf32>
    %cst_5 = arith.constant 0.000000e+00 : f32
    %7 = vector.broadcast %cst_5 : f32 to vector<512x128xf32>
    %8 = arith.maximumf %6, %7 : vector<512x128xf32>
    %9 = arith.truncf %8 : vector<512x128xf32> to vector<512x128xbf16>
    %c0_6 = arith.constant 0 : index
    %c0_7 = arith.constant 0 : index
    %10 = vector.load %arg4[%c0_6, %c0_7] : memref<128x128xbf16, #tpu.memory_space<vmem>>, vector<128x128xbf16>
    %cst_8 = arith.constant dense<0.000000e+00> : vector<512x128xf32>
    %11 = tpu.matmul %9, %10, %cst_8 {dimension_numbers = #tpu.dot_dimension_numbers<[1], [0], [0], [1], [0, 0, 1, 1], [], []>} : vector<512x128xbf16>, vector<128x128xbf16>, vector<512x128xf32> -> vector<512x128xf32>
    %c0_9 = arith.constant 0 : index
    %c0_10 = arith.constant 0 : index
    %12 = vector.load %arg5[%c0_9, %c0_10] : memref<1x128xf32, #tpu.memory_space<vmem>>, vector<1x128xf32>
    %13 = vector.broadcast %12 : vector<1x128xf32> to vector<512x128xf32>
    %14 = arith.addf %11, %13 : vector<512x128xf32>
    %cst_11 = arith.constant 0.000000e+00 : f32
    %15 = vector.broadcast %cst_11 : f32 to vector<512x128xf32>
    %16 = arith.maximumf %14, %15 : vector<512x128xf32>
    %17 = arith.truncf %16 : vector<512x128xf32> to vector<512x128xbf16>
    %c0_12 = arith.constant 0 : index
    %c0_13 = arith.constant 0 : index
    %18 = vector.load %arg6[%c0_12, %c0_13] : memref<128x8xbf16, #tpu.memory_space<vmem>>, vector<128x8xbf16>
    %cst_14 = arith.constant dense<0.000000e+00> : vector<512x8xf32>
    %19 = tpu.matmul %17, %18, %cst_14 {dimension_numbers = #tpu.dot_dimension_numbers<[1], [0], [0], [1], [0, 0, 1, 1], [], []>} : vector<512x128xbf16>, vector<128x8xbf16>, vector<512x8xf32> -> vector<512x8xf32>
    %c0_15 = arith.constant 0 : index
    %c0_16 = arith.constant 0 : index
    %20 = vector.load %arg7[%c0_15, %c0_16] : memref<1x8xf32, #tpu.memory_space<vmem>>, vector<1x8xf32>
    %21 = vector.broadcast %20 : vector<1x8xf32> to vector<512x8xf32>
    %22 = arith.addf %19, %21 : vector<512x8xf32>
    %c0_17 = arith.constant 0 : index
    %c0_18 = arith.constant 0 : index
    %23 = vector.load %arg8[%c0_17, %c0_18] : memref<512x8xf32, #tpu.memory_space<vmem>>, vector<512x8xf32>
    tpu.vector_store %arg8[%c0_17, %c0_18], %22 {strides = array<i32>} : memref<512x8xf32, #tpu.memory_space<vmem>>, vector<512x8xf32>,
    return
  }
  func.func @transform_0(%arg0: i32) -> (i32, i32) {
    %c0_i32 = arith.constant 0 : i32
    %c0_i32_0 = arith.constant 0 : i32
    return %arg0, %c0_i32 : i32, i32
  }
  func.func @transform_1(%arg0: i32) -> (i32, i32) {
    %c0_i32 = arith.constant 0 : i32
    %c0_i32_0 = arith.constant 0 : i32
    %c0_i32_1 = arith.constant 0 : i32
    return %c0_i32, %c0_i32_0 : i32, i32
  }
  func.func @transform_2(%arg0: i32) -> (i32, i32) {
    %c0_i32 = arith.constant 0 : i32
    %c0_i32_0 = arith.constant 0 : i32
    %c0_i32_1 = arith.constant 0 : i32
    return %c0_i32, %c0_i32_0 : i32, i32
  }
  func.func @transform_3(%arg0: i32) -> (i32, i32) {
    %c0_i32 = arith.constant 0 : i32
    %c0_i32_0 = arith.constant 0 : i32
    %c0_i32_1 = arith.constant 0 : i32
    return %c0_i32, %c0_i32_0 : i32, i32
  }
  func.func @transform_4(%arg0: i32) -> (i32, i32) {
    %c0_i32 = arith.constant 0 : i32
    %c0_i32_0 = arith.constant 0 : i32
    %c0_i32_1 = arith.constant 0 : i32
    return %c0_i32, %c0_i32_0 : i32, i32
  }
  func.func @transform_5(%arg0: i32) -> (i32, i32) {
    %c0_i32 = arith.constant 0 : i32
    %c0_i32_0 = arith.constant 0 : i32
    %c0_i32_1 = arith.constant 0 : i32
    return %c0_i32, %c0_i32_0 : i32, i32
  }
  func.func @transform_6(%arg0: i32) -> (i32, i32) {
    %c0_i32 = arith.constant 0 : i32
    %c0_i32_0 = arith.constant 0 : i32
    %c0_i32_1 = arith.constant 0 : i32
    return %c0_i32, %c0_i32_0 : i32, i32
  }
  func.func @transform_7(%arg0: i32) -> (i32, i32) {
    %c0_i32 = arith.constant 0 : i32
    %c0_i32_0 = arith.constant 0 : i32
    return %arg0, %c0_i32 : i32, i32
  }
}

</mosaic_0001>

<llo_original>
// kernel: dqn_forward.1
$region0: #{dqn_forward.1}
  #allocation0 [shape = 'u32[]', space=smem, size = 0x4, offset = 0x4, fixed_abs, tag = 'smem constant byte address 0x4 - core index']
  #allocation1 [shape = 'u32[144,128]{1,0:T(1,128)}', space=vmem, size = 0x12000, scoped, tag = 'internal scratch']
  %s0 = inlined_call_operand.vmem [shape: f32[512,8], index: 0, kind: input, shape index: {}]
  %s1 = inlined_call_operand.vmem [shape: bf16[8,128], index: 1, kind: input, shape index: {}]
  %s2 = inlined_call_operand.vmem [shape: f32[1,128], index: 2, kind: input, shape index: {}]
  %s3 = inlined_call_operand.vmem [shape: bf16[128,128], index: 3, kind: input, shape index: {}]
  %s4 = inlined_call_operand.vmem [shape: f32[1,128], index: 4, kind: input, shape index: {}]
  %s5 = inlined_call_operand.vmem [shape: bf16[128,8], index: 5, kind: input, shape index: {}]
  %s6 = inlined_call_operand.vmem [shape: f32[1,8], index: 6, kind: input, shape index: {}]
  %s7 = inlined_call_operand.vmem [shape: f32[512,8], index: 7, kind: output, shape index: {}]
  %s8 = sld [smem:[#allocation0]]
  $region38: #{dqn_forward.1} parent=0
    _
  %s10 = ssub.s32 1, %s8
  %s11 = scalar_select 0, %s10, %s8
  // Predicated region
  $region2: #{dqn_forward.1} parent=0 // pred_check
    _
  $region3: #{dqn_forward.1} parent=0 // pred_check_branch
    %13 = sbr.rel (0) target = $region5
  $region4: #{dqn_forward.1} parent=0 // pred_region
    _
  $region5: #{dqn_forward.1} parent=0 // pred_fallthru
    _
  // Predicated region
  $region6: #{dqn_forward.1} parent=0 // pred_check
    _
  $region7: #{dqn_forward.1} parent=0 // pred_check_branch
    %15 = sbr.rel (0) target = $region9
  $region8: #{dqn_forward.1} parent=0 // pred_region
    _
  $region9: #{dqn_forward.1} parent=0 // pred_fallthru
    _
  // Predicated region
  $region10: #{dqn_forward.1} parent=0 // pred_check
    _
  $region11: #{dqn_forward.1} parent=0 // pred_check_branch
    %17 = sbr.rel (0) target = $region13
  $region12: #{dqn_forward.1} parent=0 // pred_region
    _
  $region13: #{dqn_forward.1} parent=0 // pred_fallthru
    _
  // Predicated region
  $region14: #{dqn_forward.1} parent=0 // pred_check
    _
  $region15: #{dqn_forward.1} parent=0 // pred_check_branch
    %19 = sbr.rel (0) target = $region17
  $region16: #{dqn_forward.1} parent=0 // pred_region
    _
  $region17: #{dqn_forward.1} parent=0 // pred_fallthru
    _
  // Predicated region
  $region18: #{dqn_forward.1} parent=0 // pred_check
    _
  $region19: #{dqn_forward.1} parent=0 // pred_check_branch
    %21 = sbr.rel (0) target = $region21
  $region20: #{dqn_forward.1} parent=0 // pred_region
    _
  $region21: #{dqn_forward.1} parent=0 // pred_fallthru
    _
  // Predicated region
  $region22: #{dqn_forward.1} parent=0 // pred_check
    _
  $region23: #{dqn_forward.1} parent=0 // pred_check_branch
    %23 = sbr.rel (0) target = $region25
  $region24: #{dqn_forward.1} parent=0 // pred_region
    _
  $region25: #{dqn_forward.1} parent=0 // pred_fallthru
    _
  // Predicated region
  $region26: #{dqn_forward.1} parent=0 // pred_check
    _
  $region27: #{dqn_forward.1} parent=0 // pred_check_branch
    %25 = sbr.rel (0) target = $region29
  $region28: #{dqn_forward.1} parent=0 // pred_region
    _
  $region29: #{dqn_forward.1} parent=0 // pred_fallthru
    _
  %v27 = vld [vmem:[%s0] sm:$0xff]
  %v28 = vld [vmem:[%s0 + $0x8] sm:$0xff]
  %v29 = vld [vmem:[%s0 + $0x10] sm:$0xff]
  %v30 = vld [vmem:[%s0 + $0x18] sm:$0xff]
  %v31 = vld [vmem:[%s0 + $0x20] sm:$0xff]
  %v32 = vld [vmem:[%s0 + $0x28] sm:$0xff]
  %v33 = vld [vmem:[%s0 + $0x30] sm:$0xff]
  %v34 = vld [vmem:[%s0 + $0x38] sm:$0xff]
  %v35 = vld [vmem:[%s0 + $0x40] sm:$0xff]
  %v36 = vld [vmem:[%s0 + $0x48] sm:$0xff]
  %v37 = vld [vmem:[%s0 + $0x50] sm:$0xff]
  %v38 = vld [vmem:[%s0 + $0x58] sm:$0xff]
  %v39 = vld [vmem:[%s0 + $0x60] sm:$0xff]
  %v40 = vld [vmem:[%s0 + $0x68] sm:$0xff]
  %v41 = vld [vmem:[%s0 + $0x70] sm:$0xff]
  %v42 = vld [vmem:[%s0 + $0x78] sm:$0xff]
  %v43 = vld [vmem:[%s0 + $0x80] sm:$0xff]
  %v44 = vld [vmem:[%s0 + $0x88] sm:$0xff]
  %v45 = vld [vmem:[%s0 + $0x90] sm:$0xff]
  %v46 = vld [vmem:[%s0 + $0x98] sm:$0xff]
  %v47 = vld [vmem:[%s0 + $0xa0] sm:$0xff]
  %v48 = vld [vmem:[%s0 + $0xa8] sm:$0xff]
  %v49 = vld [vmem:[%s0 + $0xb0] sm:$0xff]
  %v50 = vld [vmem:[%s0 + $0xb8] sm:$0xff]
  %v51 = vld [vmem:[%s0 + $0xc0] sm:$0xff]
  %v52 = vld [vmem:[%s0 + $0xc8] sm:$0xff]
  %v53 = vld [vmem:[%s0 + $0xd0] sm:$0xff]
  %v54 = vld [vmem:[%s0 + $0xd8] sm:$0xff]
  %v55 = vld [vmem:[%s0 + $0xe0] sm:$0xff]
  %v56 = vld [vmem:[%s0 + $0xe8] sm:$0xff]
  %v57 = vld [vmem:[%s0 + $0xf0] sm:$0xff]
  %v58 = vld [vmem:[%s0 + $0xf8] sm:$0xff]
  %v59 = vld [vmem:[%s0 + $0x100] sm:$0xff]
  %v60 = vld [vmem:[%s0 + $0x108] sm:$0xff]
  %v61 = vld [vmem:[%s0 + $0x110] sm:$0xff]
  %v62 = vld [vmem:[%s0 + $0x118] sm:$0xff]
  %v63 = vld [vmem:[%s0 + $0x120] sm:$0xff]
  %v64 = vld [vmem:[%s0 + $0x128] sm:$0xff]
  %v65 = vld [vmem:[%s0 + $0x130] sm:$0xff]
  %v66 = vld [vmem:[%s0 + $0x138] sm:$0xff]
  %v67 = vld [vmem:[%s0 + $0x140] sm:$0xff]
  %v68 = vld [vmem:[%s0 + $0x148] sm:$0xff]
  %v69 = vld [vmem:[%s0 + $0x150] sm:$0xff]
  %v70 = vld [vmem:[%s0 + $0x158] sm:$0xff]
  %v71 = vld [vmem:[%s0 + $0x160] sm:$0xff]
  %v72 = vld [vmem:[%s0 + $0x168] sm:$0xff]
  %v73 = vld [vmem:[%s0 + $0x170] sm:$0xff]
  %v74 = vld [vmem:[%s0 + $0x178] sm:$0xff]
  %v75 = vld [vmem:[%s0 + $0x180] sm:$0xff]
  %v76 = vld [vmem:[%s0 + $0x188] sm:$0xff]
  %v77 = vld [vmem:[%s0 + $0x190] sm:$0xff]
  %v78 = vld [vmem:[%s0 + $0x198] sm:$0xff]
  %v79 = vld [vmem:[%s0 + $0x1a0] sm:$0xff]
  %v80 = vld [vmem:[%s0 + $0x1a8] sm:$0xff]
  %v81 = vld [vmem:[%s0 + $0x1b0] sm:$0xff]
  %v82 = vld [vmem:[%s0 + $0x1b8] sm:$0xff]
  %v83 = vld [vmem:[%s0 + $0x1c0] sm:$0xff]
  %v84 = vld [vmem:[%s0 + $0x1c8] sm:$0xff]
  %v85 = vld [vmem:[%s0 + $0x1d0] sm:$0xff]
  %v86 = vld [vmem:[%s0 + $0x1d8] sm:$0xff]
  %v87 = vld [vmem:[%s0 + $0x1e0] sm:$0xff]
  %v88 = vld [vmem:[%s0 + $0x1e8] sm:$0xff]
  %v89 = vld [vmem:[%s0 + $0x1f0] sm:$0xff]
  %v90 = vld [vmem:[%s0 + $0x1f8] sm:$0xff]
  %v91 = vpack.c.bf16 %v28, %v27
  %v92 = vpack.c.bf16 %v30, %v29
  %v93 = vpack.c.bf16 %v32, %v31
  %v94 = vpack.c.bf16 %v34, %v33
  %v95 = vpack.c.bf16 %v36, %v35
  %v96 = vpack.c.bf16 %v38, %v37
  %v97 = vpack.c.bf16 %v40, %v39
  %v98 = vpack.c.bf16 %v42, %v41
  %v99 = vpack.c.bf16 %v44, %v43
  %v100 = vpack.c.bf16 %v46, %v45
  %v101 = vpack.c.bf16 %v48, %v47
  %v102 = vpack.c.bf16 %v50, %v49
  %v103 = vpack.c.bf16 %v52, %v51
  %v104 = vpack.c.bf16 %v54, %v53
  %v105 = vpack.c.bf16 %v56, %v55
  %v106 = vpack.c.bf16 %v58, %v57
  %v107 = vpack.c.bf16 %v60, %v59
  %v108 = vpack.c.bf16 %v62, %v61
  %v109 = vpack.c.bf16 %v64, %v63
  %v110 = vpack.c.bf16 %v66, %v65
  %v111 = vpack.c.bf16 %v68, %v67
  %v112 = vpack.c.bf16 %v70, %v69
  %v113 = vpack.c.bf16 %v72, %v71
  %v114 = vpack.c.bf16 %v74, %v73
  %v115 = vpack.c.bf16 %v76, %v75
  %v116 = vpack.c.bf16 %v78, %v77
  %v117 = vpack.c.bf16 %v80, %v79
  %v118 = vpack.c.bf16 %v82, %v81
  %v119 = vpack.c.bf16 %v84, %v83
  %v120 = vpack.c.bf16 %v86, %v85
  %v121 = vpack.c.bf16 %v88, %v87
  %v122 = vpack.c.bf16 %v90, %v89
  %v123 = vld [vmem:[%s1] sm:$0xf]
  %v124 = vld [vmem:[%s2] sm:$0x1]
  %v126 = vlaneseq
  %v127 = vshrl.u32 %v126, 7
  %v128 = vsub.s32 0, %v127
  %v129 = vrot.slane %v124, %v128
  %vm131 = vcmask 64512
  %v133 = vsel %vm131, %v91, 0
  %v136 = vsel %vm131, %v92, 0
  %v139 = vsel %vm131, %v93, 0
  %v142 = vsel %vm131, %v94, 0
  %v145 = vsel %vm131, %v95, 0
  %v148 = vsel %vm131, %v96, 0
  %v151 = vsel %vm131, %v97, 0
  %v154 = vsel %vm131, %v98, 0
  %v157 = vsel %vm131, %v99, 0
  %v160 = vsel %vm131, %v100, 0
  %v163 = vsel %vm131, %v101, 0
  %v166 = vsel %vm131, %v102, 0
  %v169 = vsel %vm131, %v103, 0
  %v172 = vsel %vm131, %v104, 0
  %v175 = vsel %vm131, %v105, 0
  %v178 = vsel %vm131, %v106, 0
  %v181 = vsel %vm131, %v107, 0
  %v184 = vsel %vm131, %v108, 0
  %v187 = vsel %vm131, %v109, 0
  %v190 = vsel %vm131, %v110, 0
  %v193 = vsel %vm131, %v111, 0
  %v196 = vsel %vm131, %v112, 0
  %v199 = vsel %vm131, %v113, 0
  %v202 = vsel %vm131, %v114, 0
  %v205 = vsel %vm131, %v115, 0
  %v208 = vsel %vm131, %v116, 0
  %v211 = vsel %vm131, %v117, 0
  %v214 = vsel %vm131, %v118, 0
  %v217 = vsel %vm131, %v119, 0
  %v220 = vsel %vm131, %v120, 0
  %v223 = vsel %vm131, %v121, 0
  %v226 = vsel %vm131, %v122, 0
  %vm228 = vcmask 1043456
  %v230 = vsel %vm228, %v123, 0
  %232 = vmatprep.subr.bf16.mxu0 0
  %233 = vmatpush1.bf16.msra.mxu0 %v230
  %234 = vmatprep.subr.bf16.mxu0 0
  %235 = vmatpush1.bf16.msra.mxu0 0
  %236 = vmatprep.subr.bf16.mxu0 0
  %237 = vmatpush1.bf16.msra.mxu0 0
  %238 = vmatprep.subr.bf16.mxu0 0
  %239 = vmatpush1.bf16.msra.mxu0 0
  %240 = vmatprep.subr.bf16.mxu0 0
  %241 = vmatpush1.bf16.msra.mxu0 0
  %242 = vmatprep.subr.bf16.mxu0 0
  %243 = vmatpush1.bf16.msra.mxu0 0
  %244 = vmatprep.subr.bf16.mxu0 0
  %245 = vmatpush1.bf16.msra.mxu0 0
  %246 = vmatprep.subr.bf16.mxu0 0
  %247 = vmatpush1.bf16.msra.mxu0 0
  %248 = vmatprep.subr.bf16.mxu0 0
  %249 = vmatpush1.bf16.msra.mxu0 0
  %250 = vmatprep.subr.bf16.mxu0 0
  %251 = vmatpush1.bf16.msra.mxu0 0
  %252 = vmatprep.subr.bf16.mxu0 0
  %253 = vmatpush1.bf16.msra.mxu0 0
  %254 = vmatprep.subr.bf16.mxu0 0
  %255 = vmatpush1.bf16.msra.mxu0 0
  %256 = vmatprep.subr.bf16.mxu0 0
  %257 = vmatpush1.bf16.msra.mxu0 0
  %258 = vmatprep.subr.bf16.mxu0 0
  %259 = vmatpush1.bf16.msra.mxu0 0
  %260 = vmatprep.subr.bf16.mxu0 0
  %261 = vmatpush1.bf16.msra.mxu0 0
  %262 = vmatprep.subr.bf16.mxu0 0
  %263 = vmatpush1.bf16.msra.mxu0 0
  %264 = vmatprep.mubr.bf16.mxu0 0
  %265 = vmatmul.mubr.bf16.gmra.mrb[0].mxu0 %v133
  %v266 = vpop.f32.mrb[0].mxu0
  %v267 = vadd.f32 %v129, %v266
  %v268 = vpop.f32.mrb[0].mxu0
  %v269 = vpop.f32.mrb[0].mxu0
  %v270 = vadd.f32 %v129, %v269
  %v271 = vpop.f32.mrb[0].mxu0
  %272 = vmatprep.mubr.bf16.mxu0 0
  %273 = vmatmul.mubr.bf16.gmra.mrb[0].mxu0 %v136
  %v274 = vpop.f32.mrb[0].mxu0
  %v275 = vadd.f32 %v129, %v274
  %v276 = vpop.f32.mrb[0].mxu0
  %v277 = vpop.f32.mrb[0].mxu0
  %v278 = vadd.f32 %v129, %v277
  %v279 = vpop.f32.mrb[0].mxu0
  %280 = vmatprep.mubr.bf16.mxu0 0
  %281 = vmatmul.mubr.bf16.gmra.mrb[0].mxu0 %v139
  %v282 = vpop.f32.mrb[0].mxu0
  %v283 = vadd.f32 %v129, %v282
  %v284 = vpop.f32.mrb[0].mxu0
  %v285 = vpop.f32.mrb[0].mxu0
  %v286 = vadd.f32 %v129, %v285
  %v287 = vpop.f32.mrb[0].mxu0
  %288 = vmatprep.mubr.bf16.mxu0 0
  %289 = vmatmul.mubr.bf16.gmra.mrb[0].mxu0 %v142
  %v290 = vpop.f32.mrb[0].mxu0
  %v291 = vadd.f32 %v129, %v290
  %v292 = vpop.f32.mrb[0].mxu0
  %v293 = vpop.f32.mrb[0].mxu0
  %v294 = vadd.f32 %v129, %v293
  %v295 = vpop.f32.mrb[0].mxu0
  %296 = vmatprep.mubr.bf16.mxu0 0
  %297 = vmatmul.mubr.bf16.gmra.mrb[0].mxu0 %v145
  %v298 = vpop.f32.mrb[0].mxu0
  %v299 = vadd.f32 %v129, %v298
  %v300 = vpop.f32.mrb[0].mxu0
  %v301 = vpop.f32.mrb[0].mxu0
  %v302 = vadd.f32 %v129, %v301
  %v303 = vpop.f32.mrb[0].mxu0
  %304 = vmatprep.mubr.bf16.mxu0 0
  %305 = vmatmul.mubr.bf16.gmra.mrb[0].mxu0 %v148
  %v306 = vpop.f32.mrb[0].mxu0
  %v307 = vadd.f32 %v129, %v306
  %v308 = vpop.f32.mrb[0].mxu0
  %v309 = vpop.f32.mrb[0].mxu0
  %v310 = vadd.f32 %v129, %v309
  %v311 = vpop.f32.mrb[0].mxu0
  %312 = vmatprep.mubr.bf16.mxu0 0
  %313 = vmatmul.mubr.bf16.gmra.mrb[0].mxu0 %v151
  %v314 = vpop.f32.mrb[0].mxu0
  %v315 = vadd.f32 %v129, %v314
  %v316 = vpop.f32.mrb[0].mxu0
  %v317 = vpop.f32.mrb[0].mxu0
  %v318 = vadd.f32 %v129, %v317
  %v319 = vpop.f32.mrb[0].mxu0
  %320 = vmatprep.mubr.bf16.mxu0 0
  %321 = vmatmul.mubr.bf16.gmra.mrb[0].mxu0 %v154
  %v322 = vpop.f32.mrb[0].mxu0
  %v323 = vadd.f32 %v129, %v322
  %v324 = vpop.f32.mrb[0].mxu0
  %v325 = vpop.f32.mrb[0].mxu0
  %v326 = vadd.f32 %v129, %v325
  %v327 = vpop.f32.mrb[0].mxu0
  %328 = vmatprep.mubr.bf16.mxu0 0
  %329 = vmatmul.mubr.bf16.gmra.mrb[0].mxu0 %v157
  %v330 = vpop.f32.mrb[0].mxu0
  %v331 = vadd.f32 %v129, %v330
  %v332 = vpop.f32.mrb[0].mxu0
  %v333 = vpop.f32.mrb[0].mxu0
  %v334 = vadd.f32 %v129, %v333
  %v335 = vpop.f32.mrb[0].mxu0
  %336 = vmatprep.mubr.bf16.mxu0 0
  %337 = vmatmul.mubr.bf16.gmra.mrb[0].mxu0 %v160
  %v338 = vpop.f32.mrb[0].mxu0
  %v339 = vadd.f32 %v129, %v338
  %v340 = vpop.f32.mrb[0].mxu0
  %v341 = vpop.f32.mrb[0].mxu0
  %v342 = vadd.f32 %v129, %v341
  %v343 = vpop.f32.mrb[0].mxu0
  %344 = vmatprep.mubr.bf16.mxu0 0
  %345 = vmatmul.mubr.bf16.gmra.mrb[0].mxu0 %v163
  %v346 = vpop.f32.mrb[0].mxu0
  %v347 = vadd.f32 %v129, %v346
  %v348 = vpop.f32.mrb[0].mxu0
  %v349 = vpop.f32.mrb[0].mxu0
  %v350 = vadd.f32 %v129, %v349
  %v351 = vpop.f32.mrb[0].mxu0
  %352 = vmatprep.mubr.bf16.mxu0 0
  %353 = vmatmul.mubr.bf16.gmra.mrb[0].mxu0 %v166
  %v354 = vpop.f32.mrb[0].mxu0
  %v355 = vadd.f32 %v129, %v354
  %v356 = vpop.f32.mrb[0].mxu0
  %v357 = vpop.f32.mrb[0].mxu0
  %v358 = vadd.f32 %v129, %v357
  %v359 = vpop.f32.mrb[0].mxu0
  %360 = vmatprep.mubr.bf16.mxu0 0
  %361 = vmatmul.mubr.bf16.gmra.mrb[0].mxu0 %v169
  %v362 = vpop.f32.mrb[0].mxu0
  %v363 = vadd.f32 %v129, %v362
  %v364 = vpop.f32.mrb[0].mxu0
  %v365 = vpop.f32.mrb[0].mxu0
  %v366 = vadd.f32 %v129, %v365
  %v367 = vpop.f32.mrb[0].mxu0
  %368 = vmatprep.mubr.bf16.mxu0 0
  %369 = vmatmul.mubr.bf16.gmra.mrb[0].mxu0 %v172
  %v370 = vpop.f32.mrb[0].mxu0
  %v371 = vadd.f32 %v129, %v370
  %v372 = vpop.f32.mrb[0].mxu0
  %v373 = vpop.f32.mrb[0].mxu0
  %v374 = vadd.f32 %v129, %v373
  %v375 = vpop.f32.mrb[0].mxu0
  %376 = vmatprep.mubr.bf16.mxu0 0
  %377 = vmatmul.mubr.bf16.gmra.mrb[0].mxu0 %v175
  %v378 = vpop.f32.mrb[0].mxu0
  %v379 = vadd.f32 %v129, %v378
  %v380 = vpop.f32.mrb[0].mxu0
  %v381 = vpop.f32.mrb[0].mxu0
  %v382 = vadd.f32 %v129, %v381
  %v383 = vpop.f32.mrb[0].mxu0
  %384 = vmatprep.mubr.bf16.mxu0 0
  %385 = vmatmul.mubr.bf16.gmra.mrb[0].mxu0 %v178
  %v386 = vpop.f32.mrb[0].mxu0
  %v387 = vadd.f32 %v129, %v386
  %v388 = vpop.f32.mrb[0].mxu0
  %v389 = vpop.f32.mrb[0].mxu0
  %v390 = vadd.f32 %v129, %v389
  %v391 = vpop.f32.mrb[0].mxu0
  %392 = vmatprep.mubr.bf16.mxu0 0
  %393 = vmatmul.mubr.bf16.gmra.mrb[0].mxu0 %v181
  %v394 = vpop.f32.mrb[0].mxu0
  %v395 = vadd.f32 %v129, %v394
  %v396 = vpop.f32.mrb[0].mxu0
  %v397 = vpop.f32.mrb[0].mxu0
  %v398 = vadd.f32 %v129, %v397
  %v399 = vpop.f32.mrb[0].mxu0
  %400 = vmatprep.mubr.bf16.mxu0 0
  %401 = vmatmul.mubr.bf16.gmra.mrb[0].mxu0 %v184
  %v402 = vpop.f32.mrb[0].mxu0
  %v403 = vadd.f32 %v129, %v402
  %v404 = vpop.f32.mrb[0].mxu0
  %v405 = vpop.f32.mrb[0].mxu0
  %v406 = vadd.f32 %v129, %v405
  %v407 = vpop.f32.mrb[0].mxu0
  %408 = vmatprep.mubr.bf16.mxu0 0
  %409 = vmatmul.mubr.bf16.gmra.mrb[0].mxu0 %v187
  %v410 = vpop.f32.mrb[0].mxu0
  %v411 = vadd.f32 %v129, %v410
  %v412 = vpop.f32.mrb[0].mxu0
  %v413 = vpop.f32.mrb[0].mxu0
  %v414 = vadd.f32 %v129, %v413
  %v415 = vpop.f32.mrb[0].mxu0
  %416 = vmatprep.mubr.bf16.mxu0 0
  %417 = vmatmul.mubr.bf16.gmra.mrb[0].mxu0 %v190
  %v418 = vpop.f32.mrb[0].mxu0
  %v419 = vadd.f32 %v129, %v418
  %v420 = vpop.f32.mrb[0].mxu0
  %v421 = vpop.f32.mrb[0].mxu0
  %v422 = vadd.f32 %v129, %v421
  %v423 = vpop.f32.mrb[0].mxu0
  %424 = vmatprep.mubr.bf16.mxu0 0
  %425 = vmatmul.mubr.bf16.gmra.mrb[0].mxu0 %v193
  %v426 = vpop.f32.mrb[0].mxu0
  %v427 = vadd.f32 %v129, %v426
  %v428 = vpop.f32.mrb[0].mxu0
  %v429 = vpop.f32.mrb[0].mxu0
  %v430 = vadd.f32 %v129, %v429
  %v431 = vpop.f32.mrb[0].mxu0
  %432 = vmatprep.mubr.bf16.mxu0 0
  %433 = vmatmul.mubr.bf16.gmra.mrb[0].mxu0 %v196
  %v434 = vpop.f32.mrb[0].mxu0
  %v435 = vadd.f32 %v129, %v434
  %v436 = vpop.f32.mrb[0].mxu0
  %v437 = vpop.f32.mrb[0].mxu0
  %v438 = vadd.f32 %v129, %v437
  %v439 = vpop.f32.mrb[0].mxu0
  %440 = vmatprep.mubr.bf16.mxu0 0
  %441 = vmatmul.mubr.bf16.gmra.mrb[0].mxu0 %v199
  %v442 = vpop.f32.mrb[0].mxu0
  %v443 = vadd.f32 %v129, %v442
  %v444 = vpop.f32.mrb[0].mxu0
  %v445 = vpop.f32.mrb[0].mxu0
  %v446 = vadd.f32 %v129, %v445
  %v447 = vpop.f32.mrb[0].mxu0
  %448 = vmatprep.mubr.bf16.mxu0 0
  %449 = vmatmul.mubr.bf16.gmra.mrb[0].mxu0 %v202
  %v450 = vpop.f32.mrb[0].mxu0
  %v451 = vadd.f32 %v129, %v450
  %v452 = vpop.f32.mrb[0].mxu0
  %v453 = vpop.f32.mrb[0].mxu0
  %v454 = vadd.f32 %v129, %v453
  %v455 = vpop.f32.mrb[0].mxu0
  %456 = vmatprep.mubr.bf16.mxu0 0
  %457 = vmatmul.mubr.bf16.gmra.mrb[0].mxu0 %v205
  %v458 = vpop.f32.mrb[0].mxu0
  %v459 = vadd.f32 %v129, %v458
  %v460 = vpop.f32.mrb[0].mxu0
  %v461 = vpop.f32.mrb[0].mxu0
  %v462 = vadd.f32 %v129, %v461
  %v463 = vpop.f32.mrb[0].mxu0
  %464 = vmatprep.mubr.bf16.mxu0 0
  %465 = vmatmul.mubr.bf16.gmra.mrb[0].mxu0 %v208
  %v466 = vpop.f32.mrb[0].mxu0
  %v467 = vadd.f32 %v129, %v466
  %v468 = vpop.f32.mrb[0].mxu0
  %v469 = vpop.f32.mrb[0].mxu0
  %v470 = vadd.f32 %v129, %v469
  %v471 = vpop.f32.mrb[0].mxu0
  %472 = vmatprep.mubr.bf16.mxu0 0
  %473 = vmatmul.mubr.bf16.gmra.mrb[0].mxu0 %v211
  %v474 = vpop.f32.mrb[0].mxu0
  %v475 = vadd.f32 %v129, %v474
  %v476 = vpop.f32.mrb[0].mxu0
  %v477 = vpop.f32.mrb[0].mxu0
  %v478 = vadd.f32 %v129, %v477
  %v479 = vpop.f32.mrb[0].mxu0
  %480 = vmatprep.mubr.bf16.mxu0 0
  %481 = vmatmul.mubr.bf16.gmra.mrb[0].mxu0 %v214
  %v482 = vpop.f32.mrb[0].mxu0
  %v483 = vadd.f32 %v129, %v482
  %v484 = vpop.f32.mrb[0].mxu0
  %v485 = vpop.f32.mrb[0].mxu0
  %v486 = vadd.f32 %v129, %v485
  %v487 = vpop.f32.mrb[0].mxu0
  %488 = vmatprep.mubr.bf16.mxu0 0
  %489 = vmatmul.mubr.bf16.gmra.mrb[0].mxu0 %v217
  %v490 = vpop.f32.mrb[0].mxu0
  %v491 = vadd.f32 %v129, %v490
  %v492 = vpop.f32.mrb[0].mxu0
  %v493 = vpop.f32.mrb[0].mxu0
  %v494 = vadd.f32 %v129, %v493
  %v495 = vpop.f32.mrb[0].mxu0
  %496 = vmatprep.mubr.bf16.mxu0 0
  %497 = vmatmul.mubr.bf16.gmra.mrb[0].mxu0 %v220
  %v498 = vpop.f32.mrb[0].mxu0
  %v499 = vadd.f32 %v129, %v498
  %v500 = vpop.f32.mrb[0].mxu0
  %v501 = vpop.f32.mrb[0].mxu0
  %v502 = vadd.f32 %v129, %v501
  %v503 = vpop.f32.mrb[0].mxu0
  %504 = vmatprep.mubr.bf16.mxu0 0
  %505 = vmatmul.mubr.bf16.gmra.mrb[0].mxu0 %v223
  %v506 = vpop.f32.mrb[0].mxu0
  %v507 = vadd.f32 %v129, %v506
  %v508 = vpop.f32.mrb[0].mxu0
  %v509 = vpop.f32.mrb[0].mxu0
  %v510 = vadd.f32 %v129, %v509
  %v511 = vpop.f32.mrb[0].mxu0
  %512 = vmatprep.mubr.bf16.mxu0 0
  %513 = vmatmul.mubr.bf16.gmra.mrb[0].mxu0 %v226
  %v514 = vpop.f32.mrb[0].mxu0
  %v515 = vadd.f32 %v129, %v514
  %v516 = vpop.f32.mrb[0].mxu0
  %v517 = vpop.f32.mrb[0].mxu0
  %v518 = vadd.f32 %v129, %v517
  %v519 = vpop.f32.mrb[0].mxu0
  %520 = vdwg.mxu0
  %v521 = vmax.f32 %v267, 0.0
  %v522 = vmax.f32 %v270, 0.0
  %v523 = vmax.f32 %v275, 0.0
  %v524 = vmax.f32 %v278, 0.0
  %v525 = vmax.f32 %v283, 0.0
  %v526 = vmax.f32 %v286, 0.0
  %v527 = vmax.f32 %v291, 0.0
  %v528 = vmax.f32 %v294, 0.0
  %v529 = vmax.f32 %v299, 0.0
  %v530 = vmax.f32 %v302, 0.0
  %v531 = vmax.f32 %v307, 0.0
  %v532 = vmax.f32 %v310, 0.0
  %v533 = vmax.f32 %v315, 0.0
  %v534 = vmax.f32 %v318, 0.0
  %v535 = vmax.f32 %v323, 0.0
  %v536 = vmax.f32 %v326, 0.0
  %v537 = vmax.f32 %v331, 0.0
  %v538 = vmax.f32 %v334, 0.0
  %v539 = vmax.f32 %v339, 0.0
  %v540 = vmax.f32 %v342, 0.0
  %v541 = vmax.f32 %v347, 0.0
  %v542 = vmax.f32 %v350, 0.0
  %v543 = vmax.f32 %v355, 0.0
  %v544 = vmax.f32 %v358, 0.0
  %v545 = vmax.f32 %v363, 0.0
  %v546 = vmax.f32 %v366, 0.0
  %v547 = vmax.f32 %v371, 0.0
  %v548 = vmax.f32 %v374, 0.0
  %v549 = vmax.f32 %v379, 0.0
  %v550 = vmax.f32 %v382, 0.0
  %v551 = vmax.f32 %v387, 0.0
  %v552 = vmax.f32 %v390, 0.0
  %v553 = vmax.f32 %v395, 0.0
  %v554 = vmax.f32 %v398, 0.0
  %v555 = vmax.f32 %v403, 0.0
  %v556 = vmax.f32 %v406, 0.0
  %v557 = vmax.f32 %v411, 0.0
  %v558 = vmax.f32 %v414, 0.0
  %v559 = vmax.f32 %v419, 0.0
  %v560 = vmax.f32 %v422, 0.0
  %v561 = vmax.f32 %v427, 0.0
  %v562 = vmax.f32 %v430, 0.0
  %v563 = vmax.f32 %v435, 0.0
  %v564 = vmax.f32 %v438, 0.0
  %v565 = vmax.f32 %v443, 0.0
  %v566 = vmax.f32 %v446, 0.0
  %v567 = vmax.f32 %v451, 0.0
  %v568 = vmax.f32 %v454, 0.0
  %v569 = vmax.f32 %v459, 0.0
  %v570 = vmax.f32 %v462, 0.0
  %v571 = vmax.f32 %v467, 0.0
  %v572 = vmax.f32 %v470, 0.0
  %v573 = vmax.f32 %v475, 0.0
  %v574 = vmax.f32 %v478, 0.0
  %v575 = vmax.f32 %v483, 0.0
  %v576 = vmax.f32 %v486, 0.0
  %v577 = vmax.f32 %v491, 0.0
  %v578 = vmax.f32 %v494, 0.0
  %v579 = vmax.f32 %v499, 0.0
  %v580 = vmax.f32 %v502, 0.0
  %v581 = vmax.f32 %v507, 0.0
  %v582 = vmax.f32 %v510, 0.0
  %v583 = vmax.f32 %v515, 0.0
  %v584 = vmax.f32 %v518, 0.0
  %v585 = vpack.c.bf16 %v522, %v521
  %v586 = vpack.c.bf16 %v524, %v523
  %v587 = vpack.c.bf16 %v526, %v525
  %v588 = vpack.c.bf16 %v528, %v527
  %v589 = vpack.c.bf16 %v530, %v529
  %v590 = vpack.c.bf16 %v532, %v531
  %v591 = vpack.c.bf16 %v534, %v533
  %v592 = vpack.c.bf16 %v536, %v535
  %v593 = vpack.c.bf16 %v538, %v537
  %v594 = vpack.c.bf16 %v540, %v539
  %v595 = vpack.c.bf16 %v542, %v541
  %v596 = vpack.c.bf16 %v544, %v543
  %v597 = vpack.c.bf16 %v546, %v545
  %v598 = vpack.c.bf16 %v548, %v547
  %v599 = vpack.c.bf16 %v550, %v549
  %v600 = vpack.c.bf16 %v552, %v551
  %v601 = vpack.c.bf16 %v554, %v553
  %v602 = vpack.c.bf16 %v556, %v555
  %v603 = vpack.c.bf16 %v558, %v557
  %v604 = vpack.c.bf16 %v560, %v559
  %v605 = vpack.c.bf16 %v562, %v561
  %v606 = vpack.c.bf16 %v564, %v563
  %v607 = vpack.c.bf16 %v566, %v565
  %v608 = vpack.c.bf16 %v568, %v567
  %v609 = vpack.c.bf16 %v570, %v569
  %v610 = vpack.c.bf16 %v572, %v571
  %v611 = vpack.c.bf16 %v574, %v573
  %v612 = vpack.c.bf16 %v576, %v575
  %v613 = vpack.c.bf16 %v578, %v577
  %v614 = vpack.c.bf16 %v580, %v579
  %v615 = vpack.c.bf16 %v582, %v581
  %v616 = vpack.c.bf16 %v584, %v583
  %v617 = vld [vmem:[%s3] sm:$0xf]
  %v618 = vld [vmem:[%s3 + $0x4] sm:$0xf]
  %v619 = vld [vmem:[%s3 + $0x8] sm:$0xf]
  %v620 = vld [vmem:[%s3 + $0xc] sm:$0xf]
  %v621 = vld [vmem:[%s3 + $0x10] sm:$0xf]
  %v622 = vld [vmem:[%s3 + $0x14] sm:$0xf]
  %v623 = vld [vmem:[%s3 + $0x18] sm:$0xf]
  %v624 = vld [vmem:[%s3 + $0x1c] sm:$0xf]
  %v625 = vld [vmem:[%s3 + $0x20] sm:$0xf]
  %v626 = vld [vmem:[%s3 + $0x24] sm:$0xf]
  %v627 = vld [vmem:[%s3 + $0x28] sm:$0xf]
  %v628 = vld [vmem:[%s3 + $0x2c] sm:$0xf]
  %v629 = vld [vmem:[%s3 + $0x30] sm:$0xf]
  %v630 = vld [vmem:[%s3 + $0x34] sm:$0xf]
  %v631 = vld [vmem:[%s3 + $0x38] sm:$0xf]
  %v632 = vld [vmem:[%s3 + $0x3c] sm:$0xf]
  %v633 = vld [vmem:[%s4] sm:$0x1]
  %v635 = vlaneseq
  %v636 = vshrl.u32 %v635, 7
  %v637 = vsub.s32 0, %v636
  %v638 = vrot.slane %v633, %v637
  %v656 = vunpack.c.l.b16 %v617
  %v657 = vunpack.c.l.b16 %v618
  %v658 = vunpack.c.l.b16 %v619
  %v659 = vunpack.c.l.b16 %v620
  %v660 = vunpack.c.l.b16 %v621
  %v661 = vunpack.c.l.b16 %v622
  %v662 = vunpack.c.l.b16 %v623
  %v663 = vunpack.c.l.b16 %v624
  %v664 = vunpack.c.l.b16 %v625
  %v665 = vunpack.c.l.b16 %v626
  %v666 = vunpack.c.l.b16 %v627
  %v667 = vunpack.c.l.b16 %v628
  %v668 = vunpack.c.l.b16 %v629
  %v669 = vunpack.c.l.b16 %v630
  %v670 = vunpack.c.l.b16 %v631
  %v671 = vunpack.c.l.b16 %v632
  %v672 = vpack.c.b16 %v657, %v656
  %v673 = vpack.c.b16 %v659, %v658
  %v674 = vpack.c.b16 %v661, %v660
  %v675 = vpack.c.b16 %v663, %v662
  %v676 = vpack.c.b16 %v665, %v664
  %v677 = vpack.c.b16 %v667, %v666
  %v678 = vpack.c.b16 %v669, %v668
  %v679 = vpack.c.b16 %v671, %v670
  %688 = vmatprep.subr.bf16.mxu0 0
  %689 = vmatpush1.bf16.msra.mxu0 %v672
  %690 = vmatprep.subr.bf16.mxu0 0
  %691 = vmatpush1.bf16.msra.mxu0 %v673
  %692 = vmatprep.subr.bf16.mxu0 0
  %693 = vmatpush1.bf16.msra.mxu0 %v674
  %694 = vmatprep.subr.bf16.mxu0 0
  %695 = vmatpush1.bf16.msra.mxu0 %v675
  %696 = vmatprep.subr.bf16.mxu0 0
  %697 = vmatpush1.bf16.msra.mxu0 %v676
  %698 = vmatprep.subr.bf16.mxu0 0
  %699 = vmatpush1.bf16.msra.mxu0 %v677
  %700 = vmatprep.subr.bf16.mxu0 0
  %701 = vmatpush1.bf16.msra.mxu0 %v678
  %702 = vmatprep.subr.bf16.mxu0 0
  %703 = vmatpush1.bf16.msra.mxu0 %v679
  %704 = vmatprep.subr.bf16.mxu0 0
  %705 = vmatpush1.bf16.msra.mxu0 0
  %706 = vmatprep.subr.bf16.mxu0 0
  %707 = vmatpush1.bf16.msra.mxu0 0
  %708 = vmatprep.subr.bf16.mxu0 0
  %709 = vmatpush1.bf16.msra.mxu0 0
  %710 = vmatprep.subr.bf16.mxu0 0
  %711 = vmatpush1.bf16.msra.mxu0 0
  %712 = vmatprep.subr.bf16.mxu0 0
  %713 = vmatpush1.bf16.msra.mxu0 0
  %714 = vmatprep.subr.bf16.mxu0 0
  %715 = vmatpush1.bf16.msra.mxu0 0
  %716 = vmatprep.subr.bf16.mxu0 0
  %717 = vmatpush1.bf16.msra.mxu0 0
  %718 = vmatprep.subr.bf16.mxu0 0
  %719 = vmatpush1.bf16.msra.mxu0 0
  %720 = vmatprep.mubr.bf16.mxu0 0
  %721 = vmatmul.mubr.bf16.gmra.mrb[0].mxu0 %v585
  %v722 = vpop.f32.mrb[0].mxu0
  %v723 = vadd.f32 %v638, %v722
  %v724 = vpop.f32.mrb[0].mxu0
  %v725 = vpop.f32.mrb[0].mxu0
  %v726 = vadd.f32 %v638, %v725
  %v727 = vpop.f32.mrb[0].mxu0
  %728 = vmatprep.mubr.bf16.mxu0 0
  %729 = vmatmul.mubr.bf16.gmra.mrb[0].mxu0 %v586
  %v730 = vpop.f32.mrb[0].mxu0
  %v731 = vadd.f32 %v638, %v730
  %v732 = vpop.f32.mrb[0].mxu0
  %v733 = vpop.f32.mrb[0].mxu0
  %v734 = vadd.f32 %v638, %v733
  %v735 = vpop.f32.mrb[0].mxu0
  %736 = vmatprep.mubr.bf16.mxu0 0
  %737 = vmatmul.mubr.bf16.gmra.mrb[0].mxu0 %v587
  %v738 = vpop.f32.mrb[0].mxu0
  %v739 = vadd.f32 %v638, %v738
  %v740 = vpop.f32.mrb[0].mxu0
  %v741 = vpop.f32.mrb[0].mxu0
  %v742 = vadd.f32 %v638, %v741
  %v743 = vpop.f32.mrb[0].mxu0
  %744 = vmatprep.mubr.bf16.mxu0 0
  %745 = vmatmul.mubr.bf16.gmra.mrb[0].mxu0 %v588
  %v746 = vpop.f32.mrb[0].mxu0
  %v747 = vadd.f32 %v638, %v746
  %v748 = vpop.f32.mrb[0].mxu0
  %v749 = vpop.f32.mrb[0].mxu0
  %v750 = vadd.f32 %v638, %v749
  %v751 = vpop.f32.mrb[0].mxu0
  %752 = vmatprep.mubr.bf16.mxu0 0
  %753 = vmatmul.mubr.bf16.gmra.mrb[0].mxu0 %v589
  %v754 = vpop.f32.mrb[0].mxu0
  %v755 = vadd.f32 %v638, %v754
  %v756 = vpop.f32.mrb[0].mxu0
  %v757 = vpop.f32.mrb[0].mxu0
  %v758 = vadd.f32 %v638, %v757
  %v759 = vpop.f32.mrb[0].mxu0
  %760 = vmatprep.mubr.bf16.mxu0 0
  %761 = vmatmul.mubr.bf16.gmra.mrb[0].mxu0 %v590
  %v762 = vpop.f32.mrb[0].mxu0
  %v763 = vadd.f32 %v638, %v762
  %v764 = vpop.f32.mrb[0].mxu0
  %v765 = vpop.f32.mrb[0].mxu0
  %v766 = vadd.f32 %v638, %v765
  %v767 = vpop.f32.mrb[0].mxu0
  %768 = vmatprep.mubr.bf16.mxu0 0
  %769 = vmatmul.mubr.bf16.gmra.mrb[0].mxu0 %v591
  %v770 = vpop.f32.mrb[0].mxu0
  %v771 = vadd.f32 %v638, %v770
  %v772 = vpop.f32.mrb[0].mxu0
  %v773 = vpop.f32.mrb[0].mxu0
  %v774 = vadd.f32 %v638, %v773
  %v775 = vpop.f32.mrb[0].mxu0
  %776 = vmatprep.mubr.bf16.mxu0 0
  %777 = vmatmul.mubr.bf16.gmra.mrb[0].mxu0 %v592
  %v778 = vpop.f32.mrb[0].mxu0
  %v779 = vadd.f32 %v638, %v778
  %v780 = vpop.f32.mrb[0].mxu0
  %v781 = vpop.f32.mrb[0].mxu0
  %v782 = vadd.f32 %v638, %v781
  %v783 = vpop.f32.mrb[0].mxu0
  %784 = vmatprep.mubr.bf16.mxu0 0
  %785 = vmatmul.mubr.bf16.gmra.mrb[0].mxu0 %v593
  %v786 = vpop.f32.mrb[0].mxu0
  %v787 = vadd.f32 %v638, %v786
  %v788 = vpop.f32.mrb[0].mxu0
  %v789 = vpop.f32.mrb[0].mxu0
  %v790 = vadd.f32 %v638, %v789
  %v791 = vpop.f32.mrb[0].mxu0
  %792 = vmatprep.mubr.bf16.mxu0 0
  %793 = vmatmul.mubr.bf16.gmra.mrb[0].mxu0 %v594
  %v794 = vpop.f32.mrb[0].mxu0
  %v795 = vadd.f32 %v638, %v794
  %v796 = vpop.f32.mrb[0].mxu0
  %v797 = vpop.f32.mrb[0].mxu0
  %v798 = vadd.f32 %v638, %v797
  %v799 = vpop.f32.mrb[0].mxu0
  %800 = vmatprep.mubr.bf16.mxu0 0
  %801 = vmatmul.mubr.bf16.gmra.mrb[0].mxu0 %v595
  %v802 = vpop.f32.mrb[0].mxu0
  %v803 = vadd.f32 %v638, %v802
  %v804 = vpop.f32.mrb[0].mxu0
  %v805 = vpop.f32.mrb[0].mxu0
  %v806 = vadd.f32 %v638, %v805
  %v807 = vpop.f32.mrb[0].mxu0
  %808 = vmatprep.mubr.bf16.mxu0 0
  %809 = vmatmul.mubr.bf16.gmra.mrb[0].mxu0 %v596
  %v810 = vpop.f32.mrb[0].mxu0
  %v811 = vadd.f32 %v638, %v810
  %v812 = vpop.f32.mrb[0].mxu0
  %v813 = vpop.f32.mrb[0].mxu0
  %v814 = vadd.f32 %v638, %v813
  %v815 = vpop.f32.mrb[0].mxu0
  %816 = vmatprep.mubr.bf16.mxu0 0
  %817 = vmatmul.mubr.bf16.gmra.mrb[0].mxu0 %v597
  %v818 = vpop.f32.mrb[0].mxu0
  %v819 = vadd.f32 %v638, %v818
  %v820 = vpop.f32.mrb[0].mxu0
  %v821 = vpop.f32.mrb[0].mxu0
  %v822 = vadd.f32 %v638, %v821
  %v823 = vpop.f32.mrb[0].mxu0
  %824 = vmatprep.mubr.bf16.mxu0 0
  %825 = vmatmul.mubr.bf16.gmra.mrb[0].mxu0 %v598
  %v826 = vpop.f32.mrb[0].mxu0
  %v827 = vadd.f32 %v638, %v826
  %v828 = vpop.f32.mrb[0].mxu0
  %v829 = vpop.f32.mrb[0].mxu0
  %v830 = vadd.f32 %v638, %v829
  %v831 = vpop.f32.mrb[0].mxu0
  %832 = vmatprep.mubr.bf16.mxu0 0
  %833 = vmatmul.mubr.bf16.gmra.mrb[0].mxu0 %v599
  %v834 = vpop.f32.mrb[0].mxu0
  %v835 = vadd.f32 %v638, %v834
  %v836 = vpop.f32.mrb[0].mxu0
  %v837 = vpop.f32.mrb[0].mxu0
  %v838 = vadd.f32 %v638, %v837
  %v839 = vpop.f32.mrb[0].mxu0
  %840 = vmatprep.mubr.bf16.mxu0 0
  %841 = vmatmul.mubr.bf16.gmra.mrb[0].mxu0 %v600
  %v842 = vpop.f32.mrb[0].mxu0
  %v843 = vadd.f32 %v638, %v842
  %v844 = vpop.f32.mrb[0].mxu0
  %v845 = vpop.f32.mrb[0].mxu0
  %v846 = vadd.f32 %v638, %v845
  %v847 = vpop.f32.mrb[0].mxu0
  %848 = vmatprep.mubr.bf16.mxu0 0
  %849 = vmatmul.mubr.bf16.gmra.mrb[0].mxu0 %v601
  %v850 = vpop.f32.mrb[0].mxu0
  %v851 = vadd.f32 %v638, %v850
  %v852 = vpop.f32.mrb[0].mxu0
  %v853 = vpop.f32.mrb[0].mxu0
  %v854 = vadd.f32 %v638, %v853
  %v855 = vpop.f32.mrb[0].mxu0
  %856 = vmatprep.mubr.bf16.mxu0 0
  %857 = vmatmul.mubr.bf16.gmra.mrb[0].mxu0 %v602
  %v858 = vpop.f32.mrb[0].mxu0
  %v859 = vadd.f32 %v638, %v858
  %v860 = vpop.f32.mrb[0].mxu0
  %v861 = vpop.f32.mrb[0].mxu0
  %v862 = vadd.f32 %v638, %v861
  %v863 = vpop.f32.mrb[0].mxu0
  %864 = vmatprep.mubr.bf16.mxu0 0
  %865 = vmatmul.mubr.bf16.gmra.mrb[0].mxu0 %v603
  %v866 = vpop.f32.mrb[0].mxu0
  %v867 = vadd.f32 %v638, %v866
  %v868 = vpop.f32.mrb[0].mxu0
  %v869 = vpop.f32.mrb[0].mxu0
  %v870 = vadd.f32 %v638, %v869
  %v871 = vpop.f32.mrb[0].mxu0
  %872 = vmatprep.mubr.bf16.mxu0 0
  %873 = vmatmul.mubr.bf16.gmra.mrb[0].mxu0 %v604
  %v874 = vpop.f32.mrb[0].mxu0
  %v875 = vadd.f32 %v638, %v874
  %v876 = vpop.f32.mrb[0].mxu0
  %v877 = vpop.f32.mrb[0].mxu0
  %v878 = vadd.f32 %v638, %v877
  %v879 = vpop.f32.mrb[0].mxu0
  %880 = vmatprep.mubr.bf16.mxu0 0
  %881 = vmatmul.mubr.bf16.gmra.mrb[0].mxu0 %v605
  %v882 = vpop.f32.mrb[0].mxu0
  %v883 = vadd.f32 %v638, %v882
  %v884 = vpop.f32.mrb[0].mxu0
  %v885 = vpop.f32.mrb[0].mxu0
  %v886 = vadd.f32 %v638, %v885
  %v887 = vpop.f32.mrb[0].mxu0
  %888 = vmatprep.mubr.bf16.mxu0 0
  %889 = vmatmul.mubr.bf16.gmra.mrb[0].mxu0 %v606
  %v890 = vpop.f32.mrb[0].mxu0
  %v891 = vadd.f32 %v638, %v890
  %v892 = vpop.f32.mrb[0].mxu0
  %v893 = vpop.f32.mrb[0].mxu0
  %v894 = vadd.f32 %v638, %v893
  %v895 = vpop.f32.mrb[0].mxu0
  %896 = vmatprep.mubr.bf16.mxu0 0
  %897 = vmatmul.mubr.bf16.gmra.mrb[0].mxu0 %v607
  %v898 = vpop.f32.mrb[0].mxu0
  %v899 = vadd.f32 %v638, %v898
  %v900 = vpop.f32.mrb[0].mxu0
  %v901 = vpop.f32.mrb[0].mxu0
  %v902 = vadd.f32 %v638, %v901
  %v903 = vpop.f32.mrb[0].mxu0
  %904 = vmatprep.mubr.bf16.mxu0 0
  %905 = vmatmul.mubr.bf16.gmra.mrb[0].mxu0 %v608
  %v906 = vpop.f32.mrb[0].mxu0
  %v907 = vadd.f32 %v638, %v906
  %v908 = vpop.f32.mrb[0].mxu0
  %v909 = vpop.f32.mrb[0].mxu0
  %v910 = vadd.f32 %v638, %v909
  %v911 = vpop.f32.mrb[0].mxu0
  %912 = vmatprep.mubr.bf16.mxu0 0
  %913 = vmatmul.mubr.bf16.gmra.mrb[0].mxu0 %v609
  %v914 = vpop.f32.mrb[0].mxu0
  %v915 = vadd.f32 %v638, %v914
  %v916 = vpop.f32.mrb[0].mxu0
  %v917 = vpop.f32.mrb[0].mxu0
  %v918 = vadd.f32 %v638, %v917
  %v919 = vpop.f32.mrb[0].mxu0
  %920 = vmatprep.mubr.bf16.mxu0 0
  %921 = vmatmul.mubr.bf16.gmra.mrb[0].mxu0 %v610
  %v922 = vpop.f32.mrb[0].mxu0
  %v923 = vadd.f32 %v638, %v922
  %v924 = vpop.f32.mrb[0].mxu0
  %v925 = vpop.f32.mrb[0].mxu0
  %v926 = vadd.f32 %v638, %v925
  %v927 = vpop.f32.mrb[0].mxu0
  %928 = vmatprep.mubr.bf16.mxu0 0
  %929 = vmatmul.mubr.bf16.gmra.mrb[0].mxu0 %v611
  %v930 = vpop.f32.mrb[0].mxu0
  %v931 = vadd.f32 %v638, %v930
  %v932 = vpop.f32.mrb[0].mxu0
  %v933 = vpop.f32.mrb[0].mxu0
  %v934 = vadd.f32 %v638, %v933
  %v935 = vpop.f32.mrb[0].mxu0
  %936 = vmatprep.mubr.bf16.mxu0 0
  %937 = vmatmul.mubr.bf16.gmra.mrb[0].mxu0 %v612
  %v938 = vpop.f32.mrb[0].mxu0
  %v939 = vadd.f32 %v638, %v938
  %v940 = vpop.f32.mrb[0].mxu0
  %v941 = vpop.f32.mrb[0].mxu0
  %v942 = vadd.f32 %v638, %v941
  %v943 = vpop.f32.mrb[0].mxu0
  %944 = vmatprep.mubr.bf16.mxu0 0
  %945 = vmatmul.mubr.bf16.gmra.mrb[0].mxu0 %v613
  %v946 = vpop.f32.mrb[0].mxu0
  %v947 = vadd.f32 %v638, %v946
  %v948 = vpop.f32.mrb[0].mxu0
  %v949 = vpop.f32.mrb[0].mxu0
  %v950 = vadd.f32 %v638, %v949
  %v951 = vpop.f32.mrb[0].mxu0
  %952 = vmatprep.mubr.bf16.mxu0 0
  %953 = vmatmul.mubr.bf16.gmra.mrb[0].mxu0 %v614
  %v954 = vpop.f32.mrb[0].mxu0
  %v955 = vadd.f32 %v638, %v954
  %v956 = vpop.f32.mrb[0].mxu0
  %v957 = vpop.f32.mrb[0].mxu0
  %v958 = vadd.f32 %v638, %v957
  %v959 = vpop.f32.mrb[0].mxu0
  %960 = vmatprep.mubr.bf16.mxu0 0
  %961 = vmatmul.mubr.bf16.gmra.mrb[0].mxu0 %v615
  %v962 = vpop.f32.mrb[0].mxu0
  %v963 = vadd.f32 %v638, %v962
  %v964 = vpop.f32.mrb[0].mxu0
  %v965 = vpop.f32.mrb[0].mxu0
  %v966 = vadd.f32 %v638, %v965
  %v967 = vpop.f32.mrb[0].mxu0
  %968 = vmatprep.mubr.bf16.mxu0 0
  %969 = vmatmul.mubr.bf16.gmra.mrb[0].mxu0 %v616
  %v970 = vpop.f32.mrb[0].mxu0
  %v971 = vadd.f32 %v638, %v970
  %v972 = vpop.f32.mrb[0].mxu0
  %v973 = vpop.f32.mrb[0].mxu0
  %v974 = vadd.f32 %v638, %v973
  %v975 = vpop.f32.mrb[0].mxu0
  %976 = vdwg.mxu0
  %v977 = vmax.f32 %v723, 0.0
  %v978 = vmax.f32 %v726, 0.0
  %v979 = vmax.f32 %v731, 0.0
  %v980 = vmax.f32 %v734, 0.0
  %v981 = vmax.f32 %v739, 0.0
  %v982 = vmax.f32 %v742, 0.0
  %v983 = vmax.f32 %v747, 0.0
  %v984 = vmax.f32 %v750, 0.0
  %v985 = vmax.f32 %v755, 0.0
  %v986 = vmax.f32 %v758, 0.0
  %v987 = vmax.f32 %v763, 0.0
  %v988 = vmax.f32 %v766, 0.0
  %v989 = vmax.f32 %v771, 0.0
  %v990 = vmax.f32 %v774, 0.0
  %v991 = vmax.f32 %v779, 0.0
  %v992 = vmax.f32 %v782, 0.0
  %v993 = vmax.f32 %v787, 0.0
  %v994 = vmax.f32 %v790, 0.0
  %v995 = vmax.f32 %v795, 0.0
  %v996 = vmax.f32 %v798, 0.0
  %v997 = vmax.f32 %v803, 0.0
  %v998 = vmax.f32 %v806, 0.0
  %v999 = vmax.f32 %v811, 0.0
  %v1000 = vmax.f32 %v814, 0.0
  %v1001 = vmax.f32 %v819, 0.0
  %v1002 = vmax.f32 %v822, 0.0
  %v1003 = vmax.f32 %v827, 0.0
  %v1004 = vmax.f32 %v830, 0.0
  %v1005 = vmax.f32 %v835, 0.0
  %v1006 = vmax.f32 %v838, 0.0
  %v1007 = vmax.f32 %v843, 0.0
  %v1008 = vmax.f32 %v846, 0.0
  %v1009 = vmax.f32 %v851, 0.0
  %v1010 = vmax.f32 %v854, 0.0
  %v1011 = vmax.f32 %v859, 0.0
  %v1012 = vmax.f32 %v862, 0.0
  %v1013 = vmax.f32 %v867, 0.0
  %v1014 = vmax.f32 %v870, 0.0
  %v1015 = vmax.f32 %v875, 0.0
  %v1016 = vmax.f32 %v878, 0.0
  %v1017 = vmax.f32 %v883, 0.0
  %v1018 = vmax.f32 %v886, 0.0
  %v1019 = vmax.f32 %v891, 0.0
  %v1020 = vmax.f32 %v894, 0.0
  %v1021 = vmax.f32 %v899, 0.0
  %v1022 = vmax.f32 %v902, 0.0
  %v1023 = vmax.f32 %v907, 0.0
  %v1024 = vmax.f32 %v910, 0.0
  %v1025 = vmax.f32 %v915, 0.0
  %v1026 = vmax.f32 %v918, 0.0
  %v1027 = vmax.f32 %v923, 0.0
  %v1028 = vmax.f32 %v926, 0.0
  %v1029 = vmax.f32 %v931, 0.0
  %v1030 = vmax.f32 %v934, 0.0
  %v1031 = vmax.f32 %v939, 0.0
  %v1032 = vmax.f32 %v942, 0.0
  %v1033 = vmax.f32 %v947, 0.0
  %v1034 = vmax.f32 %v950, 0.0
  %v1035 = vmax.f32 %v955, 0.0
  %v1036 = vmax.f32 %v958, 0.0
  %v1037 = vmax.f32 %v963, 0.0
  %v1038 = vmax.f32 %v966, 0.0
  %v1039 = vmax.f32 %v971, 0.0
  %v1040 = vmax.f32 %v974, 0.0
  %v1041 = vpack.c.bf16 %v978, %v977
  %v1042 = vpack.c.bf16 %v980, %v979
  %v1043 = vpack.c.bf16 %v982, %v981
  %v1044 = vpack.c.bf16 %v984, %v983
  %v1045 = vpack.c.bf16 %v986, %v985
  %v1046 = vpack.c.bf16 %v988, %v987
  %v1047 = vpack.c.bf16 %v990, %v989
  %v1048 = vpack.c.bf16 %v992, %v991
  %v1049 = vpack.c.bf16 %v994, %v993
  %v1050 = vpack.c.bf16 %v996, %v995
  %v1051 = vpack.c.bf16 %v998, %v997
  %v1052 = vpack.c.bf16 %v1000, %v999
  %v1053 = vpack.c.bf16 %v1002, %v1001
  %v1054 = vpack.c.bf16 %v1004, %v1003
  %v1055 = vpack.c.bf16 %v1006, %v1005
  %v1056 = vpack.c.bf16 %v1008, %v1007
  %v1057 = vpack.c.bf16 %v1010, %v1009
  %v1058 = vpack.c.bf16 %v1012, %v1011
  %v1059 = vpack.c.bf16 %v1014, %v1013
  %v1060 = vpack.c.bf16 %v1016, %v1015
  %v1061 = vpack.c.bf16 %v1018, %v1017
  %v1062 = vpack.c.bf16 %v1020, %v1019
  %v1063 = vpack.c.bf16 %v1022, %v1021
  %v1064 = vpack.c.bf16 %v1024, %v1023
  %v1065 = vpack.c.bf16 %v1026, %v1025
  %v1066 = vpack.c.bf16 %v1028, %v1027
  %v1067 = vpack.c.bf16 %v1030, %v1029
  %v1068 = vpack.c.bf16 %v1032, %v1031
  %v1069 = vpack.c.bf16 %v1034, %v1033
  %v1070 = vpack.c.bf16 %v1036, %v1035
  %v1071 = vpack.c.bf16 %v1038, %v1037
  %v1072 = vpack.c.bf16 %v1040, %v1039
  %v1073 = vld [vmem:[%s5] sm:$0xf]
  %v1074 = vld [vmem:[%s5 + $0x4] sm:$0xf]
  %v1075 = vld [vmem:[%s5 + $0x8] sm:$0xf]
  %v1076 = vld [vmem:[%s5 + $0xc] sm:$0xf]
  %v1077 = vld [vmem:[%s5 + $0x10] sm:$0xf]
  %v1078 = vld [vmem:[%s5 + $0x14] sm:$0xf]
  %v1079 = vld [vmem:[%s5 + $0x18] sm:$0xf]
  %v1080 = vld [vmem:[%s5 + $0x1c] sm:$0xf]
  %v1081 = vld [vmem:[%s5 + $0x20] sm:$0xf]
  %v1082 = vld [vmem:[%s5 + $0x24] sm:$0xf]
  %v1083 = vld [vmem:[%s5 + $0x28] sm:$0xf]
  %v1084 = vld [vmem:[%s5 + $0x2c] sm:$0xf]
  %v1085 = vld [vmem:[%s5 + $0x30] sm:$0xf]
  %v1086 = vld [vmem:[%s5 + $0x34] sm:$0xf]
  %v1087 = vld [vmem:[%s5 + $0x38] sm:$0xf]
  %v1088 = vld [vmem:[%s5 + $0x3c] sm:$0xf]
  %v1089 = vld [vmem:[%s6] sm:$0x1]
  %v1091 = vlaneseq
  %v1092 = vshrl.u32 %v1091, 7
  %v1093 = vsub.s32 0, %v1092
  %v1094 = vrot.slane %v1089, %v1093
  %v1112 = vunpack.c.l.b16 %v1073
  %v1113 = vunpack.c.l.b16 %v1074
  %v1114 = vunpack.c.l.b16 %v1075
  %v1115 = vunpack.c.l.b16 %v1076
  %v1116 = vunpack.c.l.b16 %v1077
  %v1117 = vunpack.c.l.b16 %v1078
  %v1118 = vunpack.c.l.b16 %v1079
  %v1119 = vunpack.c.l.b16 %v1080
  %v1120 = vunpack.c.l.b16 %v1081
  %v1121 = vunpack.c.l.b16 %v1082
  %v1122 = vunpack.c.l.b16 %v1083
  %v1123 = vunpack.c.l.b16 %v1084
  %v1124 = vunpack.c.l.b16 %v1085
  %v1125 = vunpack.c.l.b16 %v1086
  %v1126 = vunpack.c.l.b16 %v1087
  %v1127 = vunpack.c.l.b16 %v1088
  %v1128 = vpack.c.b16 %v1113, %v1112
  %v1129 = vpack.c.b16 %v1115, %v1114
  %v1130 = vpack.c.b16 %v1117, %v1116
  %v1131 = vpack.c.b16 %v1119, %v1118
  %v1132 = vpack.c.b16 %v1121, %v1120
  %v1133 = vpack.c.b16 %v1123, %v1122
  %v1134 = vpack.c.b16 %v1125, %v1124
  %v1135 = vpack.c.b16 %v1127, %v1126
  %1144 = vmatprep.subr.bf16.mxu0 0
  %1145 = vmatpush1.bf16.msra.mxu0 %v1128
  %1146 = vmatprep.subr.bf16.mxu0 0
  %1147 = vmatpush1.bf16.msra.mxu0 %v1129
  %1148 = vmatprep.subr.bf16.mxu0 0
  %1149 = vmatpush1.bf16.msra.mxu0 %v1130
  %1150 = vmatprep.subr.bf16.mxu0 0
  %1151 = vmatpush1.bf16.msra.mxu0 %v1131
  %1152 = vmatprep.subr.bf16.mxu0 0
  %1153 = vmatpush1.bf16.msra.mxu0 %v1132
  %1154 = vmatprep.subr.bf16.mxu0 0
  %1155 = vmatpush1.bf16.msra.mxu0 %v1133
  %1156 = vmatprep.subr.bf16.mxu0 0
  %1157 = vmatpush1.bf16.msra.mxu0 %v1134
  %1158 = vmatprep.subr.bf16.mxu0 0
  %1159 = vmatpush1.bf16.msra.mxu0 %v1135
  %1160 = vmatprep.subr.bf16.mxu0 0
  %1161 = vmatpush1.bf16.msra.mxu0 0
  %1162 = vmatprep.subr.bf16.mxu0 0
  %1163 = vmatpush1.bf16.msra.mxu0 0
  %1164 = vmatprep.subr.bf16.mxu0 0
  %1165 = vmatpush1.bf16.msra.mxu0 0
  %1166 = vmatprep.subr.bf16.mxu0 0
  %1167 = vmatpush1.bf16.msra.mxu0 0
  %1168 = vmatprep.subr.bf16.mxu0 0
  %1169 = vmatpush1.bf16.msra.mxu0 0
  %1170 = vmatprep.subr.bf16.mxu0 0
  %1171 = vmatpush1.bf16.msra.mxu0 0
  %1172 = vmatprep.subr.bf16.mxu0 0
  %1173 = vmatpush1.bf16.msra.mxu0 0
  %1174 = vmatprep.subr.bf16.mxu0 0
  %1175 = vmatpush1.bf16.msra.mxu0 0
  %1176 = vmatprep.mubr.bf16.mxu0 0
  %1177 = vmatmul.mubr.bf16.gmra.mrb[0].mxu0 %v1041
  %v1178 = vpop.f32.mrb[0].mxu0
  %v1179 = vadd.f32 %v1094, %v1178
  %v1180 = vpop.f32.mrb[0].mxu0
  %v1181 = vpop.f32.mrb[0].mxu0
  %v1182 = vadd.f32 %v1094, %v1181
  %v1183 = vpop.f32.mrb[0].mxu0
  %1184 = vmatprep.mubr.bf16.mxu0 0
  %1185 = vmatmul.mubr.bf16.gmra.mrb[0].mxu0 %v1042
  %v1186 = vpop.f32.mrb[0].mxu0
  %v1187 = vadd.f32 %v1094, %v1186
  %v1188 = vpop.f32.mrb[0].mxu0
  %v1189 = vpop.f32.mrb[0].mxu0
  %v1190 = vadd.f32 %v1094, %v1189
  %v1191 = vpop.f32.mrb[0].mxu0
  %1192 = vmatprep.mubr.bf16.mxu0 0
  %1193 = vmatmul.mubr.bf16.gmra.mrb[0].mxu0 %v1043
  %v1194 = vpop.f32.mrb[0].mxu0
  %v1195 = vadd.f32 %v1094, %v1194
  %v1196 = vpop.f32.mrb[0].mxu0
  %v1197 = vpop.f32.mrb[0].mxu0
  %v1198 = vadd.f32 %v1094, %v1197
  %v1199 = vpop.f32.mrb[0].mxu0
  %1200 = vmatprep.mubr.bf16.mxu0 0
  %1201 = vmatmul.mubr.bf16.gmra.mrb[0].mxu0 %v1044
  %v1202 = vpop.f32.mrb[0].mxu0
  %v1203 = vadd.f32 %v1094, %v1202
  %v1204 = vpop.f32.mrb[0].mxu0
  %v1205 = vpop.f32.mrb[0].mxu0
  %v1206 = vadd.f32 %v1094, %v1205
  %v1207 = vpop.f32.mrb[0].mxu0
  %1208 = vmatprep.mubr.bf16.mxu0 0
  %1209 = vmatmul.mubr.bf16.gmra.mrb[0].mxu0 %v1045
  %v1210 = vpop.f32.mrb[0].mxu0
  %v1211 = vadd.f32 %v1094, %v1210
  %v1212 = vpop.f32.mrb[0].mxu0
  %v1213 = vpop.f32.mrb[0].mxu0
  %v1214 = vadd.f32 %v1094, %v1213
  %v1215 = vpop.f32.mrb[0].mxu0
  %1216 = vmatprep.mubr.bf16.mxu0 0
  %1217 = vmatmul.mubr.bf16.gmra.mrb[0].mxu0 %v1046
  %v1218 = vpop.f32.mrb[0].mxu0
  %v1219 = vadd.f32 %v1094, %v1218
  %v1220 = vpop.f32.mrb[0].mxu0
  %v1221 = vpop.f32.mrb[0].mxu0
  %v1222 = vadd.f32 %v1094, %v1221
  %v1223 = vpop.f32.mrb[0].mxu0
  %1224 = vmatprep.mubr.bf16.mxu0 0
  %1225 = vmatmul.mubr.bf16.gmra.mrb[0].mxu0 %v1047
  %v1226 = vpop.f32.mrb[0].mxu0
  %v1227 = vadd.f32 %v1094, %v1226
  %v1228 = vpop.f32.mrb[0].mxu0
  %v1229 = vpop.f32.mrb[0].mxu0
  %v1230 = vadd.f32 %v1094, %v1229
  %v1231 = vpop.f32.mrb[0].mxu0
  %1232 = vmatprep.mubr.bf16.mxu0 0
  %1233 = vmatmul.mubr.bf16.gmra.mrb[0].mxu0 %v1048
  %v1234 = vpop.f32.mrb[0].mxu0
  %v1235 = vadd.f32 %v1094, %v1234
  %v1236 = vpop.f32.mrb[0].mxu0
  %v1237 = vpop.f32.mrb[0].mxu0
  %v1238 = vadd.f32 %v1094, %v1237
  %v1239 = vpop.f32.mrb[0].mxu0
  %1240 = vmatprep.mubr.bf16.mxu0 0
  %1241 = vmatmul.mubr.bf16.gmra.mrb[0].mxu0 %v1049
  %v1242 = vpop.f32.mrb[0].mxu0
  %v1243 = vadd.f32 %v1094, %v1242
  %v1244 = vpop.f32.mrb[0].mxu0
  %v1245 = vpop.f32.mrb[0].mxu0
  %v1246 = vadd.f32 %v1094, %v1245
  %v1247 = vpop.f32.mrb[0].mxu0
  %1248 = vmatprep.mubr.bf16.mxu0 0
  %1249 = vmatmul.mubr.bf16.gmra.mrb[0].mxu0 %v1050
  %v1250 = vpop.f32.mrb[0].mxu0
  %v1251 = vadd.f32 %v1094, %v1250
  %v1252 = vpop.f32.mrb[0].mxu0
  %v1253 = vpop.f32.mrb[0].mxu0
  %v1254 = vadd.f32 %v1094, %v1253
  %v1255 = vpop.f32.mrb[0].mxu0
  %1256 = vmatprep.mubr.bf16.mxu0 0
  %1257 = vmatmul.mubr.bf16.gmra.mrb[0].mxu0 %v1051
  %v1258 = vpop.f32.mrb[0].mxu0
  %v1259 = vadd.f32 %v1094, %v1258
  %v1260 = vpop.f32.mrb[0].mxu0
  %v1261 = vpop.f32.mrb[0].mxu0
  %v1262 = vadd.f32 %v1094, %v1261
  %v1263 = vpop.f32.mrb[0].mxu0
  %1264 = vmatprep.mubr.bf16.mxu0 0
  %1265 = vmatmul.mubr.bf16.gmra.mrb[0].mxu0 %v1052
  %v1266 = vpop.f32.mrb[0].mxu0
  %v1267 = vadd.f32 %v1094, %v1266
  %v1268 = vpop.f32.mrb[0].mxu0
  %v1269 = vpop.f32.mrb[0].mxu0
  %v1270 = vadd.f32 %v1094, %v1269
  %v1271 = vpop.f32.mrb[0].mxu0
  %1272 = vmatprep.mubr.bf16.mxu0 0
  %1273 = vmatmul.mubr.bf16.gmra.mrb[0].mxu0 %v1053
  %v1274 = vpop.f32.mrb[0].mxu0
  %v1275 = vadd.f32 %v1094, %v1274
  %v1276 = vpop.f32.mrb[0].mxu0
  %v1277 = vpop.f32.mrb[0].mxu0
  %v1278 = vadd.f32 %v1094, %v1277
  %v1279 = vpop.f32.mrb[0].mxu0
  %1280 = vmatprep.mubr.bf16.mxu0 0
  %1281 = vmatmul.mubr.bf16.gmra.mrb[0].mxu0 %v1054
  %v1282 = vpop.f32.mrb[0].mxu0
  %v1283 = vadd.f32 %v1094, %v1282
  %v1284 = vpop.f32.mrb[0].mxu0
  %v1285 = vpop.f32.mrb[0].mxu0
  %v1286 = vadd.f32 %v1094, %v1285
  %v1287 = vpop.f32.mrb[0].mxu0
  %1288 = vmatprep.mubr.bf16.mxu0 0
  %1289 = vmatmul.mubr.bf16.gmra.mrb[0].mxu0 %v1055
  %v1290 = vpop.f32.mrb[0].mxu0
  %v1291 = vadd.f32 %v1094, %v1290
  %v1292 = vpop.f32.mrb[0].mxu0
  %v1293 = vpop.f32.mrb[0].mxu0
  %v1294 = vadd.f32 %v1094, %v1293
  %v1295 = vpop.f32.mrb[0].mxu0
  %1296 = vmatprep.mubr.bf16.mxu0 0
  %1297 = vmatmul.mubr.bf16.gmra.mrb[0].mxu0 %v1056
  %v1298 = vpop.f32.mrb[0].mxu0
  %v1299 = vadd.f32 %v1094, %v1298
  %v1300 = vpop.f32.mrb[0].mxu0
  %v1301 = vpop.f32.mrb[0].mxu0
  %v1302 = vadd.f32 %v1094, %v1301
  %v1303 = vpop.f32.mrb[0].mxu0
  %1304 = vmatprep.mubr.bf16.mxu0 0
  %1305 = vmatmul.mubr.bf16.gmra.mrb[0].mxu0 %v1057
  %v1306 = vpop.f32.mrb[0].mxu0
  %v1307 = vadd.f32 %v1094, %v1306
  %v1308 = vpop.f32.mrb[0].mxu0
  %v1309 = vpop.f32.mrb[0].mxu0
  %v1310 = vadd.f32 %v1094, %v1309
  %v1311 = vpop.f32.mrb[0].mxu0
  %1312 = vmatprep.mubr.bf16.mxu0 0
  %1313 = vmatmul.mubr.bf16.gmra.mrb[0].mxu0 %v1058
  %v1314 = vpop.f32.mrb[0].mxu0
  %v1315 = vadd.f32 %v1094, %v1314
  %v1316 = vpop.f32.mrb[0].mxu0
  %v1317 = vpop.f32.mrb[0].mxu0
  %v1318 = vadd.f32 %v1094, %v1317
  %v1319 = vpop.f32.mrb[0].mxu0
  %1320 = vmatprep.mubr.bf16.mxu0 0
  %1321 = vmatmul.mubr.bf16.gmra.mrb[0].mxu0 %v1059
  %v1322 = vpop.f32.mrb[0].mxu0
  %v1323 = vadd.f32 %v1094, %v1322
  %v1324 = vpop.f32.mrb[0].mxu0
  %v1325 = vpop.f32.mrb[0].mxu0
  %v1326 = vadd.f32 %v1094, %v1325
  %v1327 = vpop.f32.mrb[0].mxu0
  %1328 = vmatprep.mubr.bf16.mxu0 0
  %1329 = vmatmul.mubr.bf16.gmra.mrb[0].mxu0 %v1060
  %v1330 = vpop.f32.mrb[0].mxu0
  %v1331 = vadd.f32 %v1094, %v1330
  %v1332 = vpop.f32.mrb[0].mxu0
  %v1333 = vpop.f32.mrb[0].mxu0
  %v1334 = vadd.f32 %v1094, %v1333
  %v1335 = vpop.f32.mrb[0].mxu0
  %1336 = vmatprep.mubr.bf16.mxu0 0
  %1337 = vmatmul.mubr.bf16.gmra.mrb[0].mxu0 %v1061
  %v1338 = vpop.f32.mrb[0].mxu0
  %v1339 = vadd.f32 %v1094, %v1338
  %v1340 = vpop.f32.mrb[0].mxu0
  %v1341 = vpop.f32.mrb[0].mxu0
  %v1342 = vadd.f32 %v1094, %v1341
  %v1343 = vpop.f32.mrb[0].mxu0
  %1344 = vmatprep.mubr.bf16.mxu0 0
  %1345 = vmatmul.mubr.bf16.gmra.mrb[0].mxu0 %v1062
  %v1346 = vpop.f32.mrb[0].mxu0
  %v1347 = vadd.f32 %v1094, %v1346
  %v1348 = vpop.f32.mrb[0].mxu0
  %v1349 = vpop.f32.mrb[0].mxu0
  %v1350 = vadd.f32 %v1094, %v1349
  %v1351 = vpop.f32.mrb[0].mxu0
  %1352 = vmatprep.mubr.bf16.mxu0 0
  %1353 = vmatmul.mubr.bf16.gmra.mrb[0].mxu0 %v1063
  %v1354 = vpop.f32.mrb[0].mxu0
  %v1355 = vadd.f32 %v1094, %v1354
  %v1356 = vpop.f32.mrb[0].mxu0
  %v1357 = vpop.f32.mrb[0].mxu0
  %v1358 = vadd.f32 %v1094, %v1357
  %v1359 = vpop.f32.mrb[0].mxu0
  %1360 = vmatprep.mubr.bf16.mxu0 0
  %1361 = vmatmul.mubr.bf16.gmra.mrb[0].mxu0 %v1064
  %v1362 = vpop.f32.mrb[0].mxu0
  %v1363 = vadd.f32 %v1094, %v1362
  %v1364 = vpop.f32.mrb[0].mxu0
  %v1365 = vpop.f32.mrb[0].mxu0
  %v1366 = vadd.f32 %v1094, %v1365
  %v1367 = vpop.f32.mrb[0].mxu0
  %1368 = vmatprep.mubr.bf16.mxu0 0
  %1369 = vmatmul.mubr.bf16.gmra.mrb[0].mxu0 %v1065
  %v1370 = vpop.f32.mrb[0].mxu0
  %v1371 = vadd.f32 %v1094, %v1370
  %v1372 = vpop.f32.mrb[0].mxu0
  %v1373 = vpop.f32.mrb[0].mxu0
  %v1374 = vadd.f32 %v1094, %v1373
  %v1375 = vpop.f32.mrb[0].mxu0
  %1376 = vmatprep.mubr.bf16.mxu0 0
  %1377 = vmatmul.mubr.bf16.gmra.mrb[0].mxu0 %v1066
  %v1378 = vpop.f32.mrb[0].mxu0
  %v1379 = vadd.f32 %v1094, %v1378
  %v1380 = vpop.f32.mrb[0].mxu0
  %v1381 = vpop.f32.mrb[0].mxu0
  %v1382 = vadd.f32 %v1094, %v1381
  %v1383 = vpop.f32.mrb[0].mxu0
  %1384 = vmatprep.mubr.bf16.mxu0 0
  %1385 = vmatmul.mubr.bf16.gmra.mrb[0].mxu0 %v1067
  %v1386 = vpop.f32.mrb[0].mxu0
  %v1387 = vadd.f32 %v1094, %v1386
  %v1388 = vpop.f32.mrb[0].mxu0
  %v1389 = vpop.f32.mrb[0].mxu0
  %v1390 = vadd.f32 %v1094, %v1389
  %v1391 = vpop.f32.mrb[0].mxu0
  %1392 = vmatprep.mubr.bf16.mxu0 0
  %1393 = vmatmul.mubr.bf16.gmra.mrb[0].mxu0 %v1068
  %v1394 = vpop.f32.mrb[0].mxu0
  %v1395 = vadd.f32 %v1094, %v1394
  %v1396 = vpop.f32.mrb[0].mxu0
  %v1397 = vpop.f32.mrb[0].mxu0
  %v1398 = vadd.f32 %v1094, %v1397
  %v1399 = vpop.f32.mrb[0].mxu0
  %1400 = vmatprep.mubr.bf16.mxu0 0
  %1401 = vmatmul.mubr.bf16.gmra.mrb[0].mxu0 %v1069
  %v1402 = vpop.f32.mrb[0].mxu0
  %v1403 = vadd.f32 %v1094, %v1402
  %v1404 = vpop.f32.mrb[0].mxu0
  %v1405 = vpop.f32.mrb[0].mxu0
  %v1406 = vadd.f32 %v1094, %v1405
  %v1407 = vpop.f32.mrb[0].mxu0
  %1408 = vmatprep.mubr.bf16.mxu0 0
  %1409 = vmatmul.mubr.bf16.gmra.mrb[0].mxu0 %v1070
  %v1410 = vpop.f32.mrb[0].mxu0
  %v1411 = vadd.f32 %v1094, %v1410
  %v1412 = vpop.f32.mrb[0].mxu0
  %v1413 = vpop.f32.mrb[0].mxu0
  %v1414 = vadd.f32 %v1094, %v1413
  %v1415 = vpop.f32.mrb[0].mxu0
  %1416 = vmatprep.mubr.bf16.mxu0 0
  %1417 = vmatmul.mubr.bf16.gmra.mrb[0].mxu0 %v1071
  %v1418 = vpop.f32.mrb[0].mxu0
  %v1419 = vadd.f32 %v1094, %v1418
  %v1420 = vpop.f32.mrb[0].mxu0
  %v1421 = vpop.f32.mrb[0].mxu0
  %v1422 = vadd.f32 %v1094, %v1421
  %v1423 = vpop.f32.mrb[0].mxu0
  %1424 = vmatprep.mubr.bf16.mxu0 0
  %1425 = vmatmul.mubr.bf16.gmra.mrb[0].mxu0 %v1072
  %v1426 = vpop.f32.mrb[0].mxu0
  %v1427 = vadd.f32 %v1094, %v1426
  %v1428 = vpop.f32.mrb[0].mxu0
  %v1429 = vpop.f32.mrb[0].mxu0
  %v1430 = vadd.f32 %v1094, %v1429
  %v1431 = vpop.f32.mrb[0].mxu0
  %1432 = vdwg.mxu0
  %1433 = vst.msk [vmem:[%s7] sm:$0xff] %vm131, %v1179
  %1434 = vst.msk [vmem:[%s7 + $0x8] sm:$0xff] %vm131, %v1182
  %1435 = vst.msk [vmem:[%s7 + $0x10] sm:$0xff] %vm131, %v1187
  %1436 = vst.msk [vmem:[%s7 + $0x18] sm:$0xff] %vm131, %v1190
  %1437 = vst.msk [vmem:[%s7 + $0x20] sm:$0xff] %vm131, %v1195
  %1438 = vst.msk [vmem:[%s7 + $0x28] sm:$0xff] %vm131, %v1198
  %1439 = vst.msk [vmem:[%s7 + $0x30] sm:$0xff] %vm131, %v1203
  %1440 = vst.msk [vmem:[%s7 + $0x38] sm:$0xff] %vm131, %v1206
  %1441 = vst.msk [vmem:[%s7 + $0x40] sm:$0xff] %vm131, %v1211
  %1442 = vst.msk [vmem:[%s7 + $0x48] sm:$0xff] %vm131, %v1214
  %1443 = vst.msk [vmem:[%s7 + $0x50] sm:$0xff] %vm131, %v1219
  %1444 = vst.msk [vmem:[%s7 + $0x58] sm:$0xff] %vm131, %v1222
  %1445 = vst.msk [vmem:[%s7 + $0x60] sm:$0xff] %vm131, %v1227
  %1446 = vst.msk [vmem:[%s7 + $0x68] sm:$0xff] %vm131, %v1230
  %1447 = vst.msk [vmem:[%s7 + $0x70] sm:$0xff] %vm131, %v1235
  %1448 = vst.msk [vmem:[%s7 + $0x78] sm:$0xff] %vm131, %v1238
  %1449 = vst.msk [vmem:[%s7 + $0x80] sm:$0xff] %vm131, %v1243
  %1450 = vst.msk [vmem:[%s7 + $0x88] sm:$0xff] %vm131, %v1246
  %1451 = vst.msk [vmem:[%s7 + $0x90] sm:$0xff] %vm131, %v1251
  %1452 = vst.msk [vmem:[%s7 + $0x98] sm:$0xff] %vm131, %v1254
  %1453 = vst.msk [vmem:[%s7 + $0xa0] sm:$0xff] %vm131, %v1259
  %1454 = vst.msk [vmem:[%s7 + $0xa8] sm:$0xff] %vm131, %v1262
  %1455 = vst.msk [vmem:[%s7 + $0xb0] sm:$0xff] %vm131, %v1267
  %1456 = vst.msk [vmem:[%s7 + $0xb8] sm:$0xff] %vm131, %v1270
  %1457 = vst.msk [vmem:[%s7 + $0xc0] sm:$0xff] %vm131, %v1275
  %1458 = vst.msk [vmem:[%s7 + $0xc8] sm:$0xff] %vm131, %v1278
  %1459 = vst.msk [vmem:[%s7 + $0xd0] sm:$0xff] %vm131, %v1283
  %1460 = vst.msk [vmem:[%s7 + $0xd8] sm:$0xff] %vm131, %v1286
  %1461 = vst.msk [vmem:[%s7 + $0xe0] sm:$0xff] %vm131, %v1291
  %1462 = vst.msk [vmem:[%s7 + $0xe8] sm:$0xff] %vm131, %v1294
  %1463 = vst.msk [vmem:[%s7 + $0xf0] sm:$0xff] %vm131, %v1299
  %1464 = vst.msk [vmem:[%s7 + $0xf8] sm:$0xff] %vm131, %v1302
  %1465 = vst.msk [vmem:[%s7 + $0x100] sm:$0xff] %vm131, %v1307
  %1466 = vst.msk [vmem:[%s7 + $0x108] sm:$0xff] %vm131, %v1310
  %1467 = vst.msk [vmem:[%s7 + $0x110] sm:$0xff] %vm131, %v1315
  %1468 = vst.msk [vmem:[%s7 + $0x118] sm:$0xff] %vm131, %v1318
  %1469 = vst.msk [vmem:[%s7 + $0x120] sm:$0xff] %vm131, %v1323
  %1470 = vst.msk [vmem:[%s7 + $0x128] sm:$0xff] %vm131, %v1326
  %1471 = vst.msk [vmem:[%s7 + $0x130] sm:$0xff] %vm131, %v1331
  %1472 = vst.msk [vmem:[%s7 + $0x138] sm:$0xff] %vm131, %v1334
  %1473 = vst.msk [vmem:[%s7 + $0x140] sm:$0xff] %vm131, %v1339
  %1474 = vst.msk [vmem:[%s7 + $0x148] sm:$0xff] %vm131, %v1342
  %1475 = vst.msk [vmem:[%s7 + $0x150] sm:$0xff] %vm131, %v1347
  %1476 = vst.msk [vmem:[%s7 + $0x158] sm:$0xff] %vm131, %v1350
  %1477 = vst.msk [vmem:[%s7 + $0x160] sm:$0xff] %vm131, %v1355
  %1478 = vst.msk [vmem:[%s7 + $0x168] sm:$0xff] %vm131, %v1358
  %1479 = vst.msk [vmem:[%s7 + $0x170] sm:$0xff] %vm131, %v1363
  %1480 = vst.msk [vmem:[%s7 + $0x178] sm:$0xff] %vm131, %v1366
  %1481 = vst.msk [vmem:[%s7 + $0x180] sm:$0xff] %vm131, %v1371
  %1482 = vst.msk [vmem:[%s7 + $0x188] sm:$0xff] %vm131, %v1374
  %1483 = vst.msk [vmem:[%s7 + $0x190] sm:$0xff] %vm131, %v1379
  %1484 = vst.msk [vmem:[%s7 + $0x198] sm:$0xff] %vm131, %v1382
  %1485 = vst.msk [vmem:[%s7 + $0x1a0] sm:$0xff] %vm131, %v1387
  %1486 = vst.msk [vmem:[%s7 + $0x1a8] sm:$0xff] %vm131, %v1390
  %1487 = vst.msk [vmem:[%s7 + $0x1b0] sm:$0xff] %vm131, %v1395
  %1488 = vst.msk [vmem:[%s7 + $0x1b8] sm:$0xff] %vm131, %v1398
  %1489 = vst.msk [vmem:[%s7 + $0x1c0] sm:$0xff] %vm131, %v1403
  %1490 = vst.msk [vmem:[%s7 + $0x1c8] sm:$0xff] %vm131, %v1406
  %1491 = vst.msk [vmem:[%s7 + $0x1d0] sm:$0xff] %vm131, %v1411
  %1492 = vst.msk [vmem:[%s7 + $0x1d8] sm:$0xff] %vm131, %v1414
  %1493 = vst.msk [vmem:[%s7 + $0x1e0] sm:$0xff] %vm131, %v1419
  %1494 = vst.msk [vmem:[%s7 + $0x1e8] sm:$0xff] %vm131, %v1422
  %1495 = vst.msk [vmem:[%s7 + $0x1f0] sm:$0xff] %vm131, %v1427
  %1496 = vst.msk [vmem:[%s7 + $0x1f8] sm:$0xff] %vm131, %v1430
  // Predicated region
  $region30: #{dqn_forward.1} parent=0 // pred_check
    _
  $region31: #{dqn_forward.1} parent=0 // pred_check_branch
    %1498 = sbr.rel (0) target = $region33
  $region32: #{dqn_forward.1} parent=0 // pred_region
    _
  $region33: #{dqn_forward.1} parent=0 // pred_fallthru
    _
  // Predicated region
  $region34: #{dqn_forward.1} parent=0 // pred_check
    _
  $region35: #{dqn_forward.1} parent=0 // pred_check_branch
    %1500 = sbr.rel (0) target = $region37
  $region36: #{dqn_forward.1} parent=0 // pred_region
    _
  $region37: #{dqn_forward.1} parent=0 // pred_fallthru
    _

</llo_original>
